<compile_context>
chip_gen: v7x
topology: tpu7x:2x2x1
jax: 0.10.0
libtpu: 0.0.40
codegen_flags: <defaults>
</compile_context>

<pallas_src>
import functools
import math

import jax
import jax.numpy as jnp
import numpy as np
from jax.experimental import pallas as pl
from jax.experimental.pallas import tpu as pltpu


def rnn_fused_kernel(x_ref, wcat_ref, bcat_ref, whh_f_ref, whh_b_ref,
                     wlab_ref, blab_ref, o_ref, *, B, T):
    """Fused bidirectional tanh-RNN + hidden.view(B, -1) + Linear.

    x_ref    : (B*T, E)  embedded activations, batch-major rows (row = b*T + t)
    wcat_ref : (E, 2H)   [W_ih_fwd^T | W_ih_bwd^T]
    bcat_ref : (1, 2H)   [b_ih_f + b_hh_f | b_ih_b + b_hh_b]
    whh_*    : (H, H)    recurrent weights, pre-transposed
    wlab_ref : (2H, O)   label weights, pre-transposed
    blab_ref : (1, O)
    o_ref    : (B, O)
    """
    H = whh_f_ref.shape[0]

    # ---- Hoisted input projection: one big matmul, biases folded in. ----
    xw = (jnp.dot(x_ref[...], wcat_ref[...], preferred_element_type=jnp.float32)
          + bcat_ref[...])                                   # (B*T, 2H)
    xw = xw.reshape(B, T, 2 * H)                             # minor dim unchanged -> cheap

    whh_f = whh_f_ref[...]
    whh_b = whh_b_ref[...]
    h_f = jnp.zeros((B, H), jnp.float32)
    h_b = jnp.zeros((B, H), jnp.float32)

    # ---- Interleaved fwd/bwd recurrence, fully unrolled (T is static & small). ----
    # Per step & direction: one (B,H)@(H,H) MXU dot + EUP tanh; the two chains are
    # independent so the LLO scheduler can overlap them across the unrolled body.
    for t in range(T):
        xf = xw[:, t, 0:H]                                   # (B, H) static slice
        xb = xw[:, T - 1 - t, H:2 * H]                       # (B, H) static slice
        h_f = jnp.tanh(xf + jnp.dot(h_f, whh_f, preferred_element_type=jnp.float32))
        h_b = jnp.tanh(xb + jnp.dot(h_b, whh_b, preferred_element_type=jnp.float32))

    # ---- PyTorch `hidden.view(B, -1)` on the contiguous (2, B, H) stack. ----
    # Row r of the view is [stacked[2r] | stacked[2r+1]] with stacked = [h_f; h_b].
    # Assemble the even/odd row groups with static row slices (sublane-only moves, no
    # lane-crossing reshape), then apply the label Linear as two (B,H)@(H,O) dots
    # against the split weight. Faithful to torch's row-major reinterpretation.
    stacked = jnp.concatenate([h_f, h_b], axis=0)            # (2B, H)
    left = jnp.concatenate([stacked[i:i + 1] for i in range(0, 2 * B, 2)], axis=0)
    right = jnp.concatenate([stacked[i:i + 1] for i in range(1, 2 * B, 2)], axis=0)
    wlab = wlab_ref[...]                                     # (2H, O)
    o_ref[...] = (jnp.dot(left, wlab[0:H, :], preferred_element_type=jnp.float32)
                  + jnp.dot(right, wlab[H:2 * H, :], preferred_element_type=jnp.float32)
                  + blab_ref[...])


@jax.jit
def rnn_forward(text, params):
    """Pallas implementation of RNN.forward(text)."""
    emb_table = params["embedding"]                          # (V, E)
    B, T = text.shape
    E = emb_table.shape[1]
    H = params["whh_f"].shape[0]
    O = params["label_w"].shape[0]

    # Embedding lookup (gather) — plain JAX glue; padding_idx row is zero in the table.
    embedded = jnp.take(emb_table, text, axis=0)             # (B, T, E)
    x2d = embedded.reshape(B * T, E)                         # free reshape, no transpose pass

    # Concatenated input-projection weights/biases for both directions.
    wcat = jnp.concatenate([params["wih_f"].T, params["wih_b"].T], axis=1)      # (E, 2H)
    bcat = jnp.concatenate([params["bih_f"] + params["bhh_f"],
                            params["bih_b"] + params["bhh_b"]]).reshape(1, 2 * H)

    vmem = pl.BlockSpec(memory_space=pltpu.MemorySpace.VMEM)
    kernel = functools.partial(rnn_fused_kernel, B=B, T=T)

    # TODO(synk): at production-size T*B*E, stream x via memory_space=pl.ANY + a manual
    # double-buffered make_async_copy (v7x VMEM is 64 MiB) instead of full VMEM residency.
    # TODO(synk): optionally cast x/weights to bf16 for the MXU dots (kept f32 here so the
    # output matches the f32 reference bit-closely).
    out = pl.pallas_call(
        kernel,
        out_shape=jax.ShapeDtypeStruct((B, O), jnp.float32),
        in_specs=[vmem] * 7,
        out_specs=vmem,
    )(x2d, wcat, bcat,
      params["whh_f"].T, params["whh_b"].T,
      params["label_w"].T, params["label_b"].reshape(1, O))
    return out


def rnn_reference(text, params):
    """Pure-JAX reference matching PyTorch semantics (for verification)."""
    emb = jnp.take(params["embedding"], text, axis=0)        # (B, T, E)
    B, T, _ = emb.shape
    H = params["whh_f"].shape[0]
    h_f = jnp.zeros((B, H), jnp.float32)
    h_b = jnp.zeros((B, H), jnp.float32)
    for t in range(T):
        x_t = emb[:, t, :]
        h_f = jnp.tanh(x_t @ params["wih_f"].T + h_f @ params["whh_f"].T
                       + params["bih_f"] + params["bhh_f"])
    for t in range(T - 1, -1, -1):
        x_t = emb[:, t, :]
        h_b = jnp.tanh(x_t @ params["wih_b"].T + h_b @ params["whh_b"].T
                       + params["bih_b"] + params["bhh_b"])
    # torch: hidden.view(hidden.size(1), -1) — row-major reinterpretation of (2, B, H).
    hidden = jnp.stack([h_f, h_b], axis=0).reshape(B, 2 * H)
    return hidden @ params["label_w"].T + params["label_b"]


def init_params(key, vocab_size, embed_dim, hidden_size, pad_idx, out_dim=256):
    ks = jax.random.split(key, 12)
    kH = 1.0 / math.sqrt(hidden_size)
    kL = 1.0 / math.sqrt(2 * hidden_size)
    u = lambda k, shape, lim: jax.random.uniform(k, shape, jnp.float32, -lim, lim)

    emb = jax.random.normal(ks[0], (vocab_size, embed_dim), jnp.float32)
    emb = emb.at[pad_idx].set(0.0)                           # padding_idx row = 0

    return dict(
        embedding=emb,
        wih_f=u(ks[1], (hidden_size, embed_dim), kH),
        whh_f=u(ks[2], (hidden_size, hidden_size), kH),
        bih_f=u(ks[3], (hidden_size,), kH),
        bhh_f=u(ks[4], (hidden_size,), kH),
        wih_b=u(ks[5], (hidden_size, embed_dim), kH),
        whh_b=u(ks[6], (hidden_size, hidden_size), kH),
        bih_b=u(ks[7], (hidden_size,), kH),
        bhh_b=u(ks[8], (hidden_size,), kH),
        label_w=u(ks[9], (out_dim, 2 * hidden_size), kL),
        label_b=u(ks[10], (out_dim,), kL),
    )


if __name__ == "__main__":
    VOCAB_SIZE, EMBED_DIM, HIDDEN = 32, 32, 32
    B, T = 4, 8
    PAD_IDX = 0  # vocab = {'<pad>': 0, ...}

    key = jax.random.PRNGKey(0)
    k_params, k_text = jax.random.split(key)
    params = init_params(k_params, VOCAB_SIZE, EMBED_DIM, HIDDEN, PAD_IDX)
    text = jax.random.randint(k_text, (B, T), 0, VOCAB_SIZE, dtype=jnp.int32)

    out = jax.block_until_ready(rnn_forward(text, params))
    ref = jax.block_until_ready(rnn_reference(text, params))

    assert out.shape == (B, 256), out.shape
    np.testing.assert_allclose(np.asarray(out), np.asarray(ref), rtol=1e-4, atol=1e-5)
    print("KERNEL_OK")
</pallas_src>

<mosaic_0001>
module attributes {stable_mosaic.version = 11 : i64} {
  func.func @rnn_fused_kernel(%arg0: memref<32x32xf32, #tpu.memory_space<vmem>>, %arg1: memref<32x64xf32, #tpu.memory_space<vmem>>, %arg2: memref<1x64xf32, #tpu.memory_space<vmem>>, %arg3: memref<32x32xf32, #tpu.memory_space<vmem>>, %arg4: memref<32x32xf32, #tpu.memory_space<vmem>>, %arg5: memref<64x256xf32, #tpu.memory_space<vmem>>, %arg6: memref<1x256xf32, #tpu.memory_space<vmem>>, %arg7: memref<4x256xf32, #tpu.memory_space<vmem>>) attributes {dimension_semantics = [], scalar_prefetch = 0 : i64, scratch_operands = 0 : i64, tpu.core_type = #tpu.core_type<tc>} {
    %c0 = arith.constant 0 : index
    %c0_0 = arith.constant 0 : index
    %0 = vector.load %arg0[%c0, %c0_0] : memref<32x32xf32, #tpu.memory_space<vmem>>, vector<32x32xf32>
    %c0_1 = arith.constant 0 : index
    %c0_2 = arith.constant 0 : index
    %1 = vector.load %arg1[%c0_1, %c0_2] : memref<32x64xf32, #tpu.memory_space<vmem>>, vector<32x64xf32>
    %cst = arith.constant dense<0.000000e+00> : vector<32x64xf32>
    %2 = tpu.matmul %0, %1, %cst {dimension_numbers = #tpu.dot_dimension_numbers<[1], [0], [0], [1], [0, 0, 1, 1], [], []>} : vector<32x32xf32>, vector<32x64xf32>, vector<32x64xf32> -> vector<32x64xf32>
    %c0_3 = arith.constant 0 : index
    %c0_4 = arith.constant 0 : index
    %3 = vector.load %arg2[%c0_3, %c0_4] : memref<1x64xf32, #tpu.memory_space<vmem>>, vector<1x64xf32>
    %4 = vector.broadcast %3 : vector<1x64xf32> to vector<32x64xf32>
    %5 = arith.addf %2, %4 : vector<32x64xf32>
    %6 = vector.shape_cast %5 : vector<32x64xf32> to vector<4x8x64xf32>
    %c0_5 = arith.constant 0 : index
    %c0_6 = arith.constant 0 : index
    %7 = vector.load %arg3[%c0_5, %c0_6] : memref<32x32xf32, #tpu.memory_space<vmem>>, vector<32x32xf32>
    %c0_7 = arith.constant 0 : index
    %c0_8 = arith.constant 0 : index
    %8 = vector.load %arg4[%c0_7, %c0_8] : memref<32x32xf32, #tpu.memory_space<vmem>>, vector<32x32xf32>
    %cst_9 = arith.constant 0.000000e+00 : f32
    %9 = vector.broadcast %cst_9 : f32 to vector<4x32xf32>
    %cst_10 = arith.constant 0.000000e+00 : f32
    %10 = vector.broadcast %cst_10 : f32 to vector<4x32xf32>
    %11 = vector.extract_strided_slice %6 {offsets = [0, 0, 0], sizes = [4, 1, 32], strides = [1, 1, 1]} : vector<4x8x64xf32> to vector<4x1x32xf32>
    %12 = vector.shape_cast %11 : vector<4x1x32xf32> to vector<4x32xf32>
    %13 = vector.extract_strided_slice %6 {offsets = [0, 7, 32], sizes = [4, 1, 32], strides = [1, 1, 1]} : vector<4x8x64xf32> to vector<4x1x32xf32>
    %14 = vector.shape_cast %13 : vector<4x1x32xf32> to vector<4x32xf32>
    %cst_11 = arith.constant dense<0.000000e+00> : vector<4x32xf32>
    %15 = tpu.matmul %9, %7, %cst_11 {dimension_numbers = #tpu.dot_dimension_numbers<[1], [0], [0], [1], [0, 0, 1, 1], [], []>} : vector<4x32xf32>, vector<32x32xf32>, vector<4x32xf32> -> vector<4x32xf32>
    %16 = arith.addf %12, %15 : vector<4x32xf32>
    %17 = math.tanh %16 : vector<4x32xf32>
    %cst_12 = arith.constant dense<0.000000e+00> : vector<4x32xf32>
    %18 = tpu.matmul %10, %8, %cst_12 {dimension_numbers = #tpu.dot_dimension_numbers<[1], [0], [0], [1], [0, 0, 1, 1], [], []>} : vector<4x32xf32>, vector<32x32xf32>, vector<4x32xf32> -> vector<4x32xf32>
    %19 = arith.addf %14, %18 : vector<4x32xf32>
    %20 = math.tanh %19 : vector<4x32xf32>
    %21 = vector.extract_strided_slice %6 {offsets = [0, 1, 0], sizes = [4, 1, 32], strides = [1, 1, 1]} : vector<4x8x64xf32> to vector<4x1x32xf32>
    %22 = vector.shape_cast %21 : vector<4x1x32xf32> to vector<4x32xf32>
    %23 = vector.extract_strided_slice %6 {offsets = [0, 6, 32], sizes = [4, 1, 32], strides = [1, 1, 1]} : vector<4x8x64xf32> to vector<4x1x32xf32>
    %24 = vector.shape_cast %23 : vector<4x1x32xf32> to vector<4x32xf32>
    %cst_13 = arith.constant dense<0.000000e+00> : vector<4x32xf32>
    %25 = tpu.matmul %17, %7, %cst_13 {dimension_numbers = #tpu.dot_dimension_numbers<[1], [0], [0], [1], [0, 0, 1, 1], [], []>} : vector<4x32xf32>, vector<32x32xf32>, vector<4x32xf32> -> vector<4x32xf32>
    %26 = arith.addf %22, %25 : vector<4x32xf32>
    %27 = math.tanh %26 : vector<4x32xf32>
    %cst_14 = arith.constant dense<0.000000e+00> : vector<4x32xf32>
    %28 = tpu.matmul %20, %8, %cst_14 {dimension_numbers = #tpu.dot_dimension_numbers<[1], [0], [0], [1], [0, 0, 1, 1], [], []>} : vector<4x32xf32>, vector<32x32xf32>, vector<4x32xf32> -> vector<4x32xf32>
    %29 = arith.addf %24, %28 : vector<4x32xf32>
    %30 = math.tanh %29 : vector<4x32xf32>
    %31 = vector.extract_strided_slice %6 {offsets = [0, 2, 0], sizes = [4, 1, 32], strides = [1, 1, 1]} : vector<4x8x64xf32> to vector<4x1x32xf32>
    %32 = vector.shape_cast %31 : vector<4x1x32xf32> to vector<4x32xf32>
    %33 = vector.extract_strided_slice %6 {offsets = [0, 5, 32], sizes = [4, 1, 32], strides = [1, 1, 1]} : vector<4x8x64xf32> to vector<4x1x32xf32>
    %34 = vector.shape_cast %33 : vector<4x1x32xf32> to vector<4x32xf32>
    %cst_15 = arith.constant dense<0.000000e+00> : vector<4x32xf32>
    %35 = tpu.matmul %27, %7, %cst_15 {dimension_numbers = #tpu.dot_dimension_numbers<[1], [0], [0], [1], [0, 0, 1, 1], [], []>} : vector<4x32xf32>, vector<32x32xf32>, vector<4x32xf32> -> vector<4x32xf32>
    %36 = arith.addf %32, %35 : vector<4x32xf32>
    %37 = math.tanh %36 : vector<4x32xf32>
    %cst_16 = arith.constant dense<0.000000e+00> : vector<4x32xf32>
    %38 = tpu.matmul %30, %8, %cst_16 {dimension_numbers = #tpu.dot_dimension_numbers<[1], [0], [0], [1], [0, 0, 1, 1], [], []>} : vector<4x32xf32>, vector<32x32xf32>, vector<4x32xf32> -> vector<4x32xf32>
    %39 = arith.addf %34, %38 : vector<4x32xf32>
    %40 = math.tanh %39 : vector<4x32xf32>
    %41 = vector.extract_strided_slice %6 {offsets = [0, 3, 0], sizes = [4, 1, 32], strides = [1, 1, 1]} : vector<4x8x64xf32> to vector<4x1x32xf32>
    %42 = vector.shape_cast %41 : vector<4x1x32xf32> to vector<4x32xf32>
    %43 = vector.extract_strided_slice %6 {offsets = [0, 4, 32], sizes = [4, 1, 32], strides = [1, 1, 1]} : vector<4x8x64xf32> to vector<4x1x32xf32>
    %44 = vector.shape_cast %43 : vector<4x1x32xf32> to vector<4x32xf32>
    %cst_17 = arith.constant dense<0.000000e+00> : vector<4x32xf32>
    %45 = tpu.matmul %37, %7, %cst_17 {dimension_numbers = #tpu.dot_dimension_numbers<[1], [0], [0], [1], [0, 0, 1, 1], [], []>} : vector<4x32xf32>, vector<32x32xf32>, vector<4x32xf32> -> vector<4x32xf32>
    %46 = arith.addf %42, %45 : vector<4x32xf32>
    %47 = math.tanh %46 : vector<4x32xf32>
    %cst_18 = arith.constant dense<0.000000e+00> : vector<4x32xf32>
    %48 = tpu.matmul %40, %8, %cst_18 {dimension_numbers = #tpu.dot_dimension_numbers<[1], [0], [0], [1], [0, 0, 1, 1], [], []>} : vector<4x32xf32>, vector<32x32xf32>, vector<4x32xf32> -> vector<4x32xf32>
    %49 = arith.addf %44, %48 : vector<4x32xf32>
    %50 = math.tanh %49 : vector<4x32xf32>
    %51 = vector.extract_strided_slice %6 {offsets = [0, 4, 0], sizes = [4, 1, 32], strides = [1, 1, 1]} : vector<4x8x64xf32> to vector<4x1x32xf32>
    %52 = vector.shape_cast %51 : vector<4x1x32xf32> to vector<4x32xf32>
    %53 = vector.extract_strided_slice %6 {offsets = [0, 3, 32], sizes = [4, 1, 32], strides = [1, 1, 1]} : vector<4x8x64xf32> to vector<4x1x32xf32>
    %54 = vector.shape_cast %53 : vector<4x1x32xf32> to vector<4x32xf32>
    %cst_19 = arith.constant dense<0.000000e+00> : vector<4x32xf32>
    %55 = tpu.matmul %47, %7, %cst_19 {dimension_numbers = #tpu.dot_dimension_numbers<[1], [0], [0], [1], [0, 0, 1, 1], [], []>} : vector<4x32xf32>, vector<32x32xf32>, vector<4x32xf32> -> vector<4x32xf32>
    %56 = arith.addf %52, %55 : vector<4x32xf32>
    %57 = math.tanh %56 : vector<4x32xf32>
    %cst_20 = arith.constant dense<0.000000e+00> : vector<4x32xf32>
    %58 = tpu.matmul %50, %8, %cst_20 {dimension_numbers = #tpu.dot_dimension_numbers<[1], [0], [0], [1], [0, 0, 1, 1], [], []>} : vector<4x32xf32>, vector<32x32xf32>, vector<4x32xf32> -> vector<4x32xf32>
    %59 = arith.addf %54, %58 : vector<4x32xf32>
    %60 = math.tanh %59 : vector<4x32xf32>
    %61 = vector.extract_strided_slice %6 {offsets = [0, 5, 0], sizes = [4, 1, 32], strides = [1, 1, 1]} : vector<4x8x64xf32> to vector<4x1x32xf32>
    %62 = vector.shape_cast %61 : vector<4x1x32xf32> to vector<4x32xf32>
    %63 = vector.extract_strided_slice %6 {offsets = [0, 2, 32], sizes = [4, 1, 32], strides = [1, 1, 1]} : vector<4x8x64xf32> to vector<4x1x32xf32>
    %64 = vector.shape_cast %63 : vector<4x1x32xf32> to vector<4x32xf32>
    %cst_21 = arith.constant dense<0.000000e+00> : vector<4x32xf32>
    %65 = tpu.matmul %57, %7, %cst_21 {dimension_numbers = #tpu.dot_dimension_numbers<[1], [0], [0], [1], [0, 0, 1, 1], [], []>} : vector<4x32xf32>, vector<32x32xf32>, vector<4x32xf32> -> vector<4x32xf32>
    %66 = arith.addf %62, %65 : vector<4x32xf32>
    %67 = math.tanh %66 : vector<4x32xf32>
    %cst_22 = arith.constant dense<0.000000e+00> : vector<4x32xf32>
    %68 = tpu.matmul %60, %8, %cst_22 {dimension_numbers = #tpu.dot_dimension_numbers<[1], [0], [0], [1], [0, 0, 1, 1], [], []>} : vector<4x32xf32>, vector<32x32xf32>, vector<4x32xf32> -> vector<4x32xf32>
    %69 = arith.addf %64, %68 : vector<4x32xf32>
    %70 = math.tanh %69 : vector<4x32xf32>
    %71 = vector.extract_strided_slice %6 {offsets = [0, 6, 0], sizes = [4, 1, 32], strides = [1, 1, 1]} : vector<4x8x64xf32> to vector<4x1x32xf32>
    %72 = vector.shape_cast %71 : vector<4x1x32xf32> to vector<4x32xf32>
    %73 = vector.extract_strided_slice %6 {offsets = [0, 1, 32], sizes = [4, 1, 32], strides = [1, 1, 1]} : vector<4x8x64xf32> to vector<4x1x32xf32>
    %74 = vector.shape_cast %73 : vector<4x1x32xf32> to vector<4x32xf32>
    %cst_23 = arith.constant dense<0.000000e+00> : vector<4x32xf32>
    %75 = tpu.matmul %67, %7, %cst_23 {dimension_numbers = #tpu.dot_dimension_numbers<[1], [0], [0], [1], [0, 0, 1, 1], [], []>} : vector<4x32xf32>, vector<32x32xf32>, vector<4x32xf32> -> vector<4x32xf32>
    %76 = arith.addf %72, %75 : vector<4x32xf32>
    %77 = math.tanh %76 : vector<4x32xf32>
    %cst_24 = arith.constant dense<0.000000e+00> : vector<4x32xf32>
    %78 = tpu.matmul %70, %8, %cst_24 {dimension_numbers = #tpu.dot_dimension_numbers<[1], [0], [0], [1], [0, 0, 1, 1], [], []>} : vector<4x32xf32>, vector<32x32xf32>, vector<4x32xf32> -> vector<4x32xf32>
    %79 = arith.addf %74, %78 : vector<4x32xf32>
    %80 = math.tanh %79 : vector<4x32xf32>
    %81 = vector.extract_strided_slice %6 {offsets = [0, 7, 0], sizes = [4, 1, 32], strides = [1, 1, 1]} : vector<4x8x64xf32> to vector<4x1x32xf32>
    %82 = vector.shape_cast %81 : vector<4x1x32xf32> to vector<4x32xf32>
    %83 = vector.extract_strided_slice %6 {offsets = [0, 0, 32], sizes = [4, 1, 32], strides = [1, 1, 1]} : vector<4x8x64xf32> to vector<4x1x32xf32>
    %84 = vector.shape_cast %83 : vector<4x1x32xf32> to vector<4x32xf32>
    %cst_25 = arith.constant dense<0.000000e+00> : vector<4x32xf32>
    %85 = tpu.matmul %77, %7, %cst_25 {dimension_numbers = #tpu.dot_dimension_numbers<[1], [0], [0], [1], [0, 0, 1, 1], [], []>} : vector<4x32xf32>, vector<32x32xf32>, vector<4x32xf32> -> vector<4x32xf32>
    %86 = arith.addf %82, %85 : vector<4x32xf32>
    %87 = math.tanh %86 : vector<4x32xf32>
    %cst_26 = arith.constant dense<0.000000e+00> : vector<4x32xf32>
    %88 = tpu.matmul %80, %8, %cst_26 {dimension_numbers = #tpu.dot_dimension_numbers<[1], [0], [0], [1], [0, 0, 1, 1], [], []>} : vector<4x32xf32>, vector<32x32xf32>, vector<4x32xf32> -> vector<4x32xf32>
    %89 = arith.addf %84, %88 : vector<4x32xf32>
    %90 = math.tanh %89 : vector<4x32xf32>
    %91 = tpu.concatenate %87, %90 in 0 : vector<4x32xf32>, vector<4x32xf32> -> vector<8x32xf32>
    %92 = vector.extract_strided_slice %91 {offsets = [0, 0], sizes = [1, 32], strides = [1, 1]} : vector<8x32xf32> to vector<1x32xf32>
    %93 = vector.extract_strided_slice %91 {offsets = [2, 0], sizes = [1, 32], strides = [1, 1]} : vector<8x32xf32> to vector<1x32xf32>
    %94 = vector.extract_strided_slice %91 {offsets = [4, 0], sizes = [1, 32], strides = [1, 1]} : vector<8x32xf32> to vector<1x32xf32>
    %95 = vector.extract_strided_slice %91 {offsets = [6, 0], sizes = [1, 32], strides = [1, 1]} : vector<8x32xf32> to vector<1x32xf32>
    %96 = tpu.concatenate %92, %93, %94, %95 in 0 : vector<1x32xf32>, vector<1x32xf32>, vector<1x32xf32>, vector<1x32xf32> -> vector<4x32xf32>
    %97 = vector.extract_strided_slice %91 {offsets = [1, 0], sizes = [1, 32], strides = [1, 1]} : vector<8x32xf32> to vector<1x32xf32>
    %98 = vector.extract_strided_slice %91 {offsets = [3, 0], sizes = [1, 32], strides = [1, 1]} : vector<8x32xf32> to vector<1x32xf32>
    %99 = vector.extract_strided_slice %91 {offsets = [5, 0], sizes = [1, 32], strides = [1, 1]} : vector<8x32xf32> to vector<1x32xf32>
    %100 = vector.extract_strided_slice %91 {offsets = [7, 0], sizes = [1, 32], strides = [1, 1]} : vector<8x32xf32> to vector<1x32xf32>
    %101 = tpu.concatenate %97, %98, %99, %100 in 0 : vector<1x32xf32>, vector<1x32xf32>, vector<1x32xf32>, vector<1x32xf32> -> vector<4x32xf32>
    %c0_27 = arith.constant 0 : index
    %c0_28 = arith.constant 0 : index
    %102 = vector.load %arg5[%c0_27, %c0_28] : memref<64x256xf32, #tpu.memory_space<vmem>>, vector<64x256xf32>
    %103 = vector.extract_strided_slice %102 {offsets = [0, 0], sizes = [32, 256], strides = [1, 1]} : vector<64x256xf32> to vector<32x256xf32>
    %cst_29 = arith.constant dense<0.000000e+00> : vector<4x256xf32>
    %104 = tpu.matmul %96, %103, %cst_29 {dimension_numbers = #tpu.dot_dimension_numbers<[1], [0], [0], [1], [0, 0, 1, 1], [], []>} : vector<4x32xf32>, vector<32x256xf32>, vector<4x256xf32> -> vector<4x256xf32>
    %105 = vector.extract_strided_slice %102 {offsets = [32, 0], sizes = [32, 256], strides = [1, 1]} : vector<64x256xf32> to vector<32x256xf32>
    %cst_30 = arith.constant dense<0.000000e+00> : vector<4x256xf32>
    %106 = tpu.matmul %101, %105, %cst_30 {dimension_numbers = #tpu.dot_dimension_numbers<[1], [0], [0], [1], [0, 0, 1, 1], [], []>} : vector<4x32xf32>, vector<32x256xf32>, vector<4x256xf32> -> vector<4x256xf32>
    %107 = arith.addf %104, %106 : vector<4x256xf32>
    %c0_31 = arith.constant 0 : index
    %c0_32 = arith.constant 0 : index
    %108 = vector.load %arg6[%c0_31, %c0_32] : memref<1x256xf32, #tpu.memory_space<vmem>>, vector<1x256xf32>
    %109 = vector.broadcast %108 : vector<1x256xf32> to vector<4x256xf32>
    %110 = arith.addf %107, %109 : vector<4x256xf32>
    %c0_33 = arith.constant 0 : index
    %c0_34 = arith.constant 0 : index
    %111 = vector.load %arg7[%c0_33, %c0_34] : memref<4x256xf32, #tpu.memory_space<vmem>>, vector<4x256xf32>
    tpu.vector_store %arg7[%c0_33, %c0_34], %110 {strides = array<i32>} : memref<4x256xf32, #tpu.memory_space<vmem>>, vector<4x256xf32>,
    return
  }
}

</mosaic_0001>

<llo_original>
// kernel: rnn_forward.1
$region0: #{rnn_forward.1}
  #allocation0 [shape = 'u32[]', space=smem, size = 0x4, offset = 0x4, fixed_abs, tag = 'smem constant byte address 0x4 - core index']
  #allocation1 [shape = 'u32[144,128]{1,0:T(1,128)}', space=vmem, size = 0x12000, scoped, tag = 'internal scratch']
  %s0 = inlined_call_operand.vmem [shape: f32[32,32], index: 0, kind: input, shape index: {}]
  %s1 = inlined_call_operand.vmem [shape: f32[32,64], index: 1, kind: input, shape index: {}]
  %s2 = inlined_call_operand.vmem [shape: f32[1,64], index: 2, kind: input, shape index: {}]
  %s3 = inlined_call_operand.vmem [shape: f32[32,32], index: 3, kind: input, shape index: {}]
  %s4 = inlined_call_operand.vmem [shape: f32[32,32], index: 4, kind: input, shape index: {}]
  %s5 = inlined_call_operand.vmem [shape: f32[64,256], index: 5, kind: input, shape index: {}]
  %s6 = inlined_call_operand.vmem [shape: f32[1,256], index: 6, kind: input, shape index: {}]
  %s7 = inlined_call_operand.hbm [shape: f32[4,256], index: 7, kind: output, shape index: {}]
  %s8 = sld [smem:[#allocation0]]
  $region38: #{rnn_forward.1} parent=0
    _
  %s10 = ssub.s32 1, %s8
  %s11 = scalar_select 0, %s10, %s8
  $region1: #{rnn_forward.1} parent=0
    #allocation2 [shape = 'u8[4096]{0}', space=vmem, size = 0x1000, scoped, tag = 'output window, operand 0, single buffered']
    #allocation3 [shape = 's32[1]{0}', space=sflag, size = 0x4, scoped, tag = 'scoped memory for rnn_forward.1']
    %12 = vsyncpa [#allocation3], 0
    // Predicated region
    $region2: #{rnn_forward.1} parent=1 // pred_check
      _
    $region3: #{rnn_forward.1} parent=1 // pred_check_branch
      %14 = sbr.rel (0) target = $region5
    $region4: #{rnn_forward.1} parent=1 // pred_region
      _
    $region5: #{rnn_forward.1} parent=1 // pred_fallthru
      _
    // Predicated region
    $region6: #{rnn_forward.1} parent=1 // pred_check
      _
    $region7: #{rnn_forward.1} parent=1 // pred_check_branch
      %16 = sbr.rel (0) target = $region9
    $region8: #{rnn_forward.1} parent=1 // pred_region
      _
    $region9: #{rnn_forward.1} parent=1 // pred_fallthru
      _
    // Predicated region
    $region10: #{rnn_forward.1} parent=1 // pred_check
      _
    $region11: #{rnn_forward.1} parent=1 // pred_check_branch
      %18 = sbr.rel (0) target = $region13
    $region12: #{rnn_forward.1} parent=1 // pred_region
      _
    $region13: #{rnn_forward.1} parent=1 // pred_fallthru
      _
    // Predicated region
    $region14: #{rnn_forward.1} parent=1 // pred_check
      _
    $region15: #{rnn_forward.1} parent=1 // pred_check_branch
      %20 = sbr.rel (0) target = $region17
    $region16: #{rnn_forward.1} parent=1 // pred_region
      _
    $region17: #{rnn_forward.1} parent=1 // pred_fallthru
      _
    // Predicated region
    $region18: #{rnn_forward.1} parent=1 // pred_check
      _
    $region19: #{rnn_forward.1} parent=1 // pred_check_branch
      %22 = sbr.rel (0) target = $region21
    $region20: #{rnn_forward.1} parent=1 // pred_region
      _
    $region21: #{rnn_forward.1} parent=1 // pred_fallthru
      _
    // Predicated region
    $region22: #{rnn_forward.1} parent=1 // pred_check
      _
    $region23: #{rnn_forward.1} parent=1 // pred_check_branch
      %24 = sbr.rel (0) target = $region25
    $region24: #{rnn_forward.1} parent=1 // pred_region
      _
    $region25: #{rnn_forward.1} parent=1 // pred_fallthru
      _
    // Predicated region
    $region26: #{rnn_forward.1} parent=1 // pred_check
      _
    $region27: #{rnn_forward.1} parent=1 // pred_check_branch
      %26 = sbr.rel (0) target = $region29
    $region28: #{rnn_forward.1} parent=1 // pred_region
      _
    $region29: #{rnn_forward.1} parent=1 // pred_fallthru
      _
    %v27 = vld [vmem:[%s0] sm:$0xff]
    %v28 = vld [vmem:[%s0 + $0x8] sm:$0xff]
    %v29 = vld [vmem:[%s0 + $0x10] sm:$0xff]
    %v30 = vld [vmem:[%s0 + $0x18] sm:$0xff]
    %v31 = vld [vmem:[%s1] sm:$0xff]
    %v32 = vld [vmem:[%s1 + $0x8] sm:$0xff]
    %v33 = vld [vmem:[%s1 + $0x10] sm:$0xff]
    %v34 = vld [vmem:[%s1 + $0x18] sm:$0xff]
    %v35 = vld [vmem:[%s2] sm:$0x1]
    %v37 = vlaneseq
    %v38 = vshrl.u32 %v37, 7
    %v39 = vsub.s32 0, %v38
    %v40 = vrot.slane %v35, %v39
    %vm42 = vcmask 261120
    %v44 = vsel %vm42, %v27, 0
    %v47 = vsel %vm42, %v28, 0
    %v50 = vsel %vm42, %v29, 0
    %v53 = vsel %vm42, %v30, 0
    %55 = vmatprep.subr.mxu0 0.0
    %56 = vmatpush1.msra.mxu0 %v31
    %57 = vmatprep.subr.mxu0 0.0
    %58 = vmatpush1.msra.mxu0 %v32
    %59 = vmatprep.subr.mxu0 0.0
    %60 = vmatpush1.msra.mxu0 %v33
    %61 = vmatprep.subr.mxu0 0.0
    %62 = vmatpush1.msra.mxu0 %v34
    %63 = vmatprep.subr.mxu0 0.0
    %64 = vmatpush1.msra.mxu0 0.0
    %65 = vmatprep.subr.mxu0 0.0
    %66 = vmatpush1.msra.mxu0 0.0
    %67 = vmatprep.subr.mxu0 0.0
    %68 = vmatpush1.msra.mxu0 0.0
    %69 = vmatprep.subr.mxu0 0.0
    %70 = vmatpush1.msra.mxu0 0.0
    %71 = vmatprep.subr.mxu0 0.0
    %72 = vmatpush1.msra.mxu0 0.0
    %73 = vmatprep.subr.mxu0 0.0
    %74 = vmatpush1.msra.mxu0 0.0
    %75 = vmatprep.subr.mxu0 0.0
    %76 = vmatpush1.msra.mxu0 0.0
    %77 = vmatprep.subr.mxu0 0.0
    %78 = vmatpush1.msra.mxu0 0.0
    %79 = vmatprep.subr.mxu0 0.0
    %80 = vmatpush1.msra.mxu0 0.0
    %81 = vmatprep.subr.mxu0 0.0
    %82 = vmatpush1.msra.mxu0 0.0
    %83 = vmatprep.subr.mxu0 0.0
    %84 = vmatpush1.msra.mxu0 0.0
    %85 = vmatprep.subr.mxu0 0.0
    %86 = vmatpush1.msra.mxu0 0.0
    %87 = vmatprep.subr.mxu0 0.0
    %88 = vmatpush1.msra.mxu0 0.0
    %89 = vmatprep.subr.mxu0 0.0
    %90 = vmatpush1.msra.mxu0 0.0
    %91 = vmatprep.subr.mxu0 0.0
    %92 = vmatpush1.msra.mxu0 0.0
    %93 = vmatprep.subr.mxu0 0.0
    %94 = vmatpush1.msra.mxu0 0.0
    %95 = vmatprep.subr.mxu0 0.0
    %96 = vmatpush1.msra.mxu0 0.0
    %97 = vmatprep.subr.mxu0 0.0
    %98 = vmatpush1.msra.mxu0 0.0
    %99 = vmatprep.subr.mxu0 0.0
    %100 = vmatpush1.msra.mxu0 0.0
    %101 = vmatprep.subr.mxu0 0.0
    %102 = vmatpush1.msra.mxu0 0.0
    %103 = vmatprep.subr.mxu0 0.0
    %104 = vmatpush1.msra.mxu0 0.0
    %105 = vmatprep.subr.mxu0 0.0
    %106 = vmatpush1.msra.mxu0 0.0
    %107 = vmatprep.subr.mxu0 0.0
    %108 = vmatpush1.msra.mxu0 0.0
    %109 = vmatprep.subr.mxu0 0.0
    %110 = vmatpush1.msra.mxu0 0.0
    %111 = vmatprep.subr.mxu0 0.0
    %112 = vmatpush1.msra.mxu0 0.0
    %113 = vmatprep.subr.mxu0 0.0
    %114 = vmatpush1.msra.mxu0 0.0
    %115 = vmatprep.subr.mxu0 0.0
    %116 = vmatpush1.msra.mxu0 0.0
    %117 = vmatprep.subr.mxu0 0.0
    %118 = vmatpush1.msra.mxu0 0.0
    %119 = vmatprep.mubr.f32.mxu0 0.0
    %120 = vmatmul.mubr.f32.gmra.mrb[0].mxu0 %v44
    %v121 = vpop.f32.mrb[0].mxu0
    %v122 = vadd.f32 %v40, %v121
    %v123 = vpop.f32.mrb[0].mxu0
    %124 = vmatprep.mubr.f32.mxu0 0.0
    %125 = vmatmul.mubr.f32.gmra.mrb[0].mxu0 %v47
    %v126 = vpop.f32.mrb[0].mxu0
    %v127 = vadd.f32 %v40, %v126
    %v128 = vpop.f32.mrb[0].mxu0
    %129 = vmatprep.mubr.f32.mxu0 0.0
    %130 = vmatmul.mubr.f32.gmra.mrb[0].mxu0 %v50
    %v131 = vpop.f32.mrb[0].mxu0
    %v132 = vadd.f32 %v40, %v131
    %v133 = vpop.f32.mrb[0].mxu0
    %134 = vmatprep.mubr.f32.mxu0 0.0
    %135 = vmatmul.mubr.f32.gmra.mrb[0].mxu0 %v53
    %v136 = vpop.f32.mrb[0].mxu0
    %v137 = vadd.f32 %v40, %v136
    %v138 = vpop.f32.mrb[0].mxu0
    %139 = vdwg.mxu0
    %v140 = vld [vmem:[%s3] sm:$0xff]
    %v141 = vld [vmem:[%s3 + $0x8] sm:$0xff]
    %v142 = vld [vmem:[%s3 + $0x10] sm:$0xff]
    %v143 = vld [vmem:[%s3 + $0x18] sm:$0xff]
    %v144 = vld [vmem:[%s4] sm:$0xff]
    %v145 = vld [vmem:[%s4 + $0x8] sm:$0xff]
    %v146 = vld [vmem:[%s4 + $0x10] sm:$0xff]
    %v147 = vld [vmem:[%s4 + $0x18] sm:$0xff]
    %v149 = vsel %vm42, 0.0, 0
    %151 = vmatprep.subr.mxu0 0.0
    %152 = vmatpush1.msra.mxu0 %v140
    %153 = vmatprep.subr.mxu0 0.0
    %154 = vmatpush1.msra.mxu0 %v141
    %155 = vmatprep.subr.mxu0 0.0
    %156 = vmatpush1.msra.mxu0 %v142
    %157 = vmatprep.subr.mxu0 0.0
    %158 = vmatpush1.msra.mxu0 %v143
    %159 = vmatprep.subr.mxu0 0.0
    %160 = vmatpush1.msra.mxu0 0.0
    %161 = vmatprep.subr.mxu0 0.0
    %162 = vmatpush1.msra.mxu0 0.0
    %163 = vmatprep.subr.mxu0 0.0
    %164 = vmatpush1.msra.mxu0 0.0
    %165 = vmatprep.subr.mxu0 0.0
    %166 = vmatpush1.msra.mxu0 0.0
    %167 = vmatprep.subr.mxu0 0.0
    %168 = vmatpush1.msra.mxu0 0.0
    %169 = vmatprep.subr.mxu0 0.0
    %170 = vmatpush1.msra.mxu0 0.0
    %171 = vmatprep.subr.mxu0 0.0
    %172 = vmatpush1.msra.mxu0 0.0
    %173 = vmatprep.subr.mxu0 0.0
    %174 = vmatpush1.msra.mxu0 0.0
    %175 = vmatprep.subr.mxu0 0.0
    %176 = vmatpush1.msra.mxu0 0.0
    %177 = vmatprep.subr.mxu0 0.0
    %178 = vmatpush1.msra.mxu0 0.0
    %179 = vmatprep.subr.mxu0 0.0
    %180 = vmatpush1.msra.mxu0 0.0
    %181 = vmatprep.subr.mxu0 0.0
    %182 = vmatpush1.msra.mxu0 0.0
    %183 = vmatprep.subr.mxu0 0.0
    %184 = vmatpush1.msra.mxu0 0.0
    %185 = vmatprep.subr.mxu0 0.0
    %186 = vmatpush1.msra.mxu0 0.0
    %187 = vmatprep.subr.mxu0 0.0
    %188 = vmatpush1.msra.mxu0 0.0
    %189 = vmatprep.subr.mxu0 0.0
    %190 = vmatpush1.msra.mxu0 0.0
    %191 = vmatprep.subr.mxu0 0.0
    %192 = vmatpush1.msra.mxu0 0.0
    %193 = vmatprep.subr.mxu0 0.0
    %194 = vmatpush1.msra.mxu0 0.0
    %195 = vmatprep.subr.mxu0 0.0
    %196 = vmatpush1.msra.mxu0 0.0
    %197 = vmatprep.subr.mxu0 0.0
    %198 = vmatpush1.msra.mxu0 0.0
    %199 = vmatprep.subr.mxu0 0.0
    %200 = vmatpush1.msra.mxu0 0.0
    %201 = vmatprep.subr.mxu0 0.0
    %202 = vmatpush1.msra.mxu0 0.0
    %203 = vmatprep.subr.mxu0 0.0
    %204 = vmatpush1.msra.mxu0 0.0
    %205 = vmatprep.subr.mxu0 0.0
    %206 = vmatpush1.msra.mxu0 0.0
    %207 = vmatprep.subr.mxu0 0.0
    %208 = vmatpush1.msra.mxu0 0.0
    %209 = vmatprep.subr.mxu0 0.0
    %210 = vmatpush1.msra.mxu0 0.0
    %211 = vmatprep.subr.mxu0 0.0
    %212 = vmatpush1.msra.mxu0 0.0
    %213 = vmatprep.subr.mxu0 0.0
    %214 = vmatpush1.msra.mxu0 0.0
    %215 = vmatprep.mubr.f32.mxu0 0.0
    %216 = vmatmul.mubr.f32.gmra.mrb[0].mxu0 %v149
    %v217 = vpop.f32.mrb[0].mxu0
    %v218 = vadd.f32 0.0, %v217
    %v219 = vpop.f32.mrb[0].mxu0
    %220 = vdwg.mxu0
    %v222 = vrot.slane %v218, 1
    %v223 = vrot.slane %v218, 2
    %v224 = vrot.slane %v218, 3
    %v229 = vadd.f32 %v122, %v218
    %v230 = vadd.f32 %v127, %v222
    %v231 = vadd.f32 %v132, %v223
    %v232 = vadd.f32 %v137, %v224
    %v233 = vtanh.pop %v229
    %v234 = vtanh.pop %v230
    %v235 = vtanh.pop %v231
    %v236 = vtanh.pop %v232
    %237 = vmatprep.subr.mxu0 0.0
    %238 = vmatpush1.msra.mxu0 %v144
    %239 = vmatprep.subr.mxu0 0.0
    %240 = vmatpush1.msra.mxu0 %v145
    %241 = vmatprep.subr.mxu0 0.0
    %242 = vmatpush1.msra.mxu0 %v146
    %243 = vmatprep.subr.mxu0 0.0
    %244 = vmatpush1.msra.mxu0 %v147
    %245 = vmatprep.subr.mxu0 0.0
    %246 = vmatpush1.msra.mxu0 0.0
    %247 = vmatprep.subr.mxu0 0.0
    %248 = vmatpush1.msra.mxu0 0.0
    %249 = vmatprep.subr.mxu0 0.0
    %250 = vmatpush1.msra.mxu0 0.0
    %251 = vmatprep.subr.mxu0 0.0
    %252 = vmatpush1.msra.mxu0 0.0
    %253 = vmatprep.subr.mxu0 0.0
    %254 = vmatpush1.msra.mxu0 0.0
    %255 = vmatprep.subr.mxu0 0.0
    %256 = vmatpush1.msra.mxu0 0.0
    %257 = vmatprep.subr.mxu0 0.0
    %258 = vmatpush1.msra.mxu0 0.0
    %259 = vmatprep.subr.mxu0 0.0
    %260 = vmatpush1.msra.mxu0 0.0
    %261 = vmatprep.subr.mxu0 0.0
    %262 = vmatpush1.msra.mxu0 0.0
    %263 = vmatprep.subr.mxu0 0.0
    %264 = vmatpush1.msra.mxu0 0.0
    %265 = vmatprep.subr.mxu0 0.0
    %266 = vmatpush1.msra.mxu0 0.0
    %267 = vmatprep.subr.mxu0 0.0
    %268 = vmatpush1.msra.mxu0 0.0
    %269 = vmatprep.subr.mxu0 0.0
    %270 = vmatpush1.msra.mxu0 0.0
    %271 = vmatprep.subr.mxu0 0.0
    %272 = vmatpush1.msra.mxu0 0.0
    %273 = vmatprep.subr.mxu0 0.0
    %274 = vmatpush1.msra.mxu0 0.0
    %275 = vmatprep.subr.mxu0 0.0
    %276 = vmatpush1.msra.mxu0 0.0
    %277 = vmatprep.subr.mxu0 0.0
    %278 = vmatpush1.msra.mxu0 0.0
    %279 = vmatprep.subr.mxu0 0.0
    %280 = vmatpush1.msra.mxu0 0.0
    %281 = vmatprep.subr.mxu0 0.0
    %282 = vmatpush1.msra.mxu0 0.0
    %283 = vmatprep.subr.mxu0 0.0
    %284 = vmatpush1.msra.mxu0 0.0
    %285 = vmatprep.subr.mxu0 0.0
    %286 = vmatpush1.msra.mxu0 0.0
    %287 = vmatprep.subr.mxu0 0.0
    %288 = vmatpush1.msra.mxu0 0.0
    %289 = vmatprep.subr.mxu0 0.0
    %290 = vmatpush1.msra.mxu0 0.0
    %291 = vmatprep.subr.mxu0 0.0
    %292 = vmatpush1.msra.mxu0 0.0
    %293 = vmatprep.subr.mxu0 0.0
    %294 = vmatpush1.msra.mxu0 0.0
    %295 = vmatprep.subr.mxu0 0.0
    %296 = vmatpush1.msra.mxu0 0.0
    %297 = vmatprep.subr.mxu0 0.0
    %298 = vmatpush1.msra.mxu0 0.0
    %299 = vmatprep.subr.mxu0 0.0
    %300 = vmatpush1.msra.mxu0 0.0
    %301 = vmatprep.mubr.f32.mxu0 0.0
    %302 = vmatmul.mubr.f32.gmra.mrb[0].mxu0 %v149
    %v303 = vpop.f32.mrb[0].mxu0
    %v304 = vadd.f32 0.0, %v303
    %v305 = vpop.f32.mrb[0].mxu0
    %306 = vdwg.mxu0
    %v308 = vrot.slane %v304, 1
    %v309 = vrot.slane %v304, 2
    %v310 = vrot.slane %v304, 3
    %v311 = vrot.slane %v304, 4
    %312 = vrot.lane.b32.xlu0 %v308, 32
    %v313 = vpop.permute.xlu0 %312
    %314 = vrot.lane.b32.xlu0 %v309, 32
    %v315 = vpop.permute.xlu0 %314
    %316 = vrot.lane.b32.xlu0 %v310, 32
    %v317 = vpop.permute.xlu0 %316
    %318 = vrot.lane.b32.xlu0 %v311, 32
    %v319 = vpop.permute.xlu0 %318
    %v324 = vadd.f32 %v122, %v313
    %v325 = vadd.f32 %v127, %v315
    %v326 = vadd.f32 %v132, %v317
    %v327 = vadd.f32 %v137, %v319
    %v328 = vtanh.pop %v324
    %v329 = vtanh.pop %v325
    %v330 = vtanh.pop %v326
    %v331 = vtanh.pop %v327
    %v336 = vrot.slane %v234, 7
    %vm337 = vcmask 1041409
    %v338 = vsel %vm337, %v336, %v233
    %v339 = vrot.slane %v235, 6
    %vm340 = vcmask 1042434
    %v341 = vsel %vm340, %v339, %v338
    %v342 = vrot.slane %v236, 5
    %vm343 = vcmask 1043459
    %v344 = vsel %vm343, %v342, %v341
    %v345 = vsel %vm42, %v344, 0
    %347 = vmatprep.subr.mxu0 0.0
    %348 = vmatpush1.msra.mxu0 %v140
    %349 = vmatprep.subr.mxu0 0.0
    %350 = vmatpush1.msra.mxu0 %v141
    %351 = vmatprep.subr.mxu0 0.0
    %352 = vmatpush1.msra.mxu0 %v142
    %353 = vmatprep.subr.mxu0 0.0
    %354 = vmatpush1.msra.mxu0 %v143
    %355 = vmatprep.subr.mxu0 0.0
    %356 = vmatpush1.msra.mxu0 0.0
    %357 = vmatprep.subr.mxu0 0.0
    %358 = vmatpush1.msra.mxu0 0.0
    %359 = vmatprep.subr.mxu0 0.0
    %360 = vmatpush1.msra.mxu0 0.0
    %361 = vmatprep.subr.mxu0 0.0
    %362 = vmatpush1.msra.mxu0 0.0
    %363 = vmatprep.subr.mxu0 0.0
    %364 = vmatpush1.msra.mxu0 0.0
    %365 = vmatprep.subr.mxu0 0.0
    %366 = vmatpush1.msra.mxu0 0.0
    %367 = vmatprep.subr.mxu0 0.0
    %368 = vmatpush1.msra.mxu0 0.0
    %369 = vmatprep.subr.mxu0 0.0
    %370 = vmatpush1.msra.mxu0 0.0
    %371 = vmatprep.subr.mxu0 0.0
    %372 = vmatpush1.msra.mxu0 0.0
    %373 = vmatprep.subr.mxu0 0.0
    %374 = vmatpush1.msra.mxu0 0.0
    %375 = vmatprep.subr.mxu0 0.0
    %376 = vmatpush1.msra.mxu0 0.0
    %377 = vmatprep.subr.mxu0 0.0
    %378 = vmatpush1.msra.mxu0 0.0
    %379 = vmatprep.subr.mxu0 0.0
    %380 = vmatpush1.msra.mxu0 0.0
    %381 = vmatprep.subr.mxu0 0.0
    %382 = vmatpush1.msra.mxu0 0.0
    %383 = vmatprep.subr.mxu0 0.0
    %384 = vmatpush1.msra.mxu0 0.0
    %385 = vmatprep.subr.mxu0 0.0
    %386 = vmatpush1.msra.mxu0 0.0
    %387 = vmatprep.subr.mxu0 0.0
    %388 = vmatpush1.msra.mxu0 0.0
    %389 = vmatprep.subr.mxu0 0.0
    %390 = vmatpush1.msra.mxu0 0.0
    %391 = vmatprep.subr.mxu0 0.0
    %392 = vmatpush1.msra.mxu0 0.0
    %393 = vmatprep.subr.mxu0 0.0
    %394 = vmatpush1.msra.mxu0 0.0
    %395 = vmatprep.subr.mxu0 0.0
    %396 = vmatpush1.msra.mxu0 0.0
    %397 = vmatprep.subr.mxu0 0.0
    %398 = vmatpush1.msra.mxu0 0.0
    %399 = vmatprep.subr.mxu0 0.0
    %400 = vmatpush1.msra.mxu0 0.0
    %401 = vmatprep.subr.mxu0 0.0
    %402 = vmatpush1.msra.mxu0 0.0
    %403 = vmatprep.subr.mxu0 0.0
    %404 = vmatpush1.msra.mxu0 0.0
    %405 = vmatprep.subr.mxu0 0.0
    %406 = vmatpush1.msra.mxu0 0.0
    %407 = vmatprep.subr.mxu0 0.0
    %408 = vmatpush1.msra.mxu0 0.0
    %409 = vmatprep.subr.mxu0 0.0
    %410 = vmatpush1.msra.mxu0 0.0
    %411 = vmatprep.mubr.f32.mxu0 0.0
    %412 = vmatmul.mubr.f32.gmra.mrb[0].mxu0 %v345
    %v413 = vpop.f32.mrb[0].mxu0
    %v414 = vadd.f32 0.0, %v413
    %v415 = vpop.f32.mrb[0].mxu0
    %416 = vdwg.mxu0
    %v418 = vrot.slane %v414, 7
    %v419 = vrot.slane %v414, 1
    %v420 = vrot.slane %v414, 2
    %v425 = vadd.f32 %v122, %v418
    %v426 = vadd.f32 %v127, %v414
    %v427 = vadd.f32 %v132, %v419
    %v428 = vadd.f32 %v137, %v420
    %v429 = vtanh.pop %v425
    %v430 = vtanh.pop %v426
    %v431 = vtanh.pop %v427
    %v432 = vtanh.pop %v428
    %v437 = vrot.slane %v328, 7
    %v438 = vrot.slane %v329, 6
    %v439 = vsel %vm337, %v438, %v437
    %v440 = vrot.slane %v330, 5
    %v441 = vsel %vm340, %v440, %v439
    %v442 = vrot.slane %v331, 4
    %v443 = vsel %vm343, %v442, %v441
    %444 = vrot.lane.b32.xlu0 %v443, 96
    %v445 = vpop.permute.xlu0 %444
    %v446 = vsel %vm42, %v445, 0
    %448 = vmatprep.subr.mxu0 0.0
    %449 = vmatpush1.msra.mxu0 %v144
    %450 = vmatprep.subr.mxu0 0.0
    %451 = vmatpush1.msra.mxu0 %v145
    %452 = vmatprep.subr.mxu0 0.0
    %453 = vmatpush1.msra.mxu0 %v146
    %454 = vmatprep.subr.mxu0 0.0
    %455 = vmatpush1.msra.mxu0 %v147
    %456 = vmatprep.subr.mxu0 0.0
    %457 = vmatpush1.msra.mxu0 0.0
    %458 = vmatprep.subr.mxu0 0.0
    %459 = vmatpush1.msra.mxu0 0.0
    %460 = vmatprep.subr.mxu0 0.0
    %461 = vmatpush1.msra.mxu0 0.0
    %462 = vmatprep.subr.mxu0 0.0
    %463 = vmatpush1.msra.mxu0 0.0
    %464 = vmatprep.subr.mxu0 0.0
    %465 = vmatpush1.msra.mxu0 0.0
    %466 = vmatprep.subr.mxu0 0.0
    %467 = vmatpush1.msra.mxu0 0.0
    %468 = vmatprep.subr.mxu0 0.0
    %469 = vmatpush1.msra.mxu0 0.0
    %470 = vmatprep.subr.mxu0 0.0
    %471 = vmatpush1.msra.mxu0 0.0
    %472 = vmatprep.subr.mxu0 0.0
    %473 = vmatpush1.msra.mxu0 0.0
    %474 = vmatprep.subr.mxu0 0.0
    %475 = vmatpush1.msra.mxu0 0.0
    %476 = vmatprep.subr.mxu0 0.0
    %477 = vmatpush1.msra.mxu0 0.0
    %478 = vmatprep.subr.mxu0 0.0
    %479 = vmatpush1.msra.mxu0 0.0
    %480 = vmatprep.subr.mxu0 0.0
    %481 = vmatpush1.msra.mxu0 0.0
    %482 = vmatprep.subr.mxu0 0.0
    %483 = vmatpush1.msra.mxu0 0.0
    %484 = vmatprep.subr.mxu0 0.0
    %485 = vmatpush1.msra.mxu0 0.0
    %486 = vmatprep.subr.mxu0 0.0
    %487 = vmatpush1.msra.mxu0 0.0
    %488 = vmatprep.subr.mxu0 0.0
    %489 = vmatpush1.msra.mxu0 0.0
    %490 = vmatprep.subr.mxu0 0.0
    %491 = vmatpush1.msra.mxu0 0.0
    %492 = vmatprep.subr.mxu0 0.0
    %493 = vmatpush1.msra.mxu0 0.0
    %494 = vmatprep.subr.mxu0 0.0
    %495 = vmatpush1.msra.mxu0 0.0
    %496 = vmatprep.subr.mxu0 0.0
    %497 = vmatpush1.msra.mxu0 0.0
    %498 = vmatprep.subr.mxu0 0.0
    %499 = vmatpush1.msra.mxu0 0.0
    %500 = vmatprep.subr.mxu0 0.0
    %501 = vmatpush1.msra.mxu0 0.0
    %502 = vmatprep.subr.mxu0 0.0
    %503 = vmatpush1.msra.mxu0 0.0
    %504 = vmatprep.subr.mxu0 0.0
    %505 = vmatpush1.msra.mxu0 0.0
    %506 = vmatprep.subr.mxu0 0.0
    %507 = vmatpush1.msra.mxu0 0.0
    %508 = vmatprep.subr.mxu0 0.0
    %509 = vmatpush1.msra.mxu0 0.0
    %510 = vmatprep.subr.mxu0 0.0
    %511 = vmatpush1.msra.mxu0 0.0
    %512 = vmatprep.mubr.f32.mxu0 0.0
    %513 = vmatmul.mubr.f32.gmra.mrb[0].mxu0 %v446
    %v514 = vpop.f32.mrb[0].mxu0
    %v515 = vadd.f32 0.0, %v514
    %v516 = vpop.f32.mrb[0].mxu0
    %517 = vdwg.mxu0
    %v519 = vrot.slane %v515, 2
    %v520 = vrot.slane %v515, 3
    %v521 = vrot.slane %v515, 4
    %v522 = vrot.slane %v515, 5
    %523 = vrot.lane.b32.xlu0 %v519, 32
    %v524 = vpop.permute.xlu0 %523
    %525 = vrot.lane.b32.xlu0 %v520, 32
    %v526 = vpop.permute.xlu0 %525
    %527 = vrot.lane.b32.xlu0 %v521, 32
    %v528 = vpop.permute.xlu0 %527
    %529 = vrot.lane.b32.xlu0 %v522, 32
    %v530 = vpop.permute.xlu0 %529
    %v535 = vadd.f32 %v122, %v524
    %v536 = vadd.f32 %v127, %v526
    %v537 = vadd.f32 %v132, %v528
    %v538 = vadd.f32 %v137, %v530
    %v539 = vtanh.pop %v535
    %v540 = vtanh.pop %v536
    %v541 = vtanh.pop %v537
    %v542 = vtanh.pop %v538
    %v547 = vrot.slane %v429, 1
    %v548 = vsel %vm337, %v430, %v547
    %v549 = vrot.slane %v431, 7
    %v550 = vsel %vm340, %v549, %v548
    %v551 = vrot.slane %v432, 6
    %v552 = vsel %vm343, %v551, %v550
    %v553 = vsel %vm42, %v552, 0
    %555 = vmatprep.subr.mxu0 0.0
    %556 = vmatpush1.msra.mxu0 %v140
    %557 = vmatprep.subr.mxu0 0.0
    %558 = vmatpush1.msra.mxu0 %v141
    %559 = vmatprep.subr.mxu0 0.0
    %560 = vmatpush1.msra.mxu0 %v142
    %561 = vmatprep.subr.mxu0 0.0
    %562 = vmatpush1.msra.mxu0 %v143
    %563 = vmatprep.subr.mxu0 0.0
    %564 = vmatpush1.msra.mxu0 0.0
    %565 = vmatprep.subr.mxu0 0.0
    %566 = vmatpush1.msra.mxu0 0.0
    %567 = vmatprep.subr.mxu0 0.0
    %568 = vmatpush1.msra.mxu0 0.0
    %569 = vmatprep.subr.mxu0 0.0
    %570 = vmatpush1.msra.mxu0 0.0
    %571 = vmatprep.subr.mxu0 0.0
    %572 = vmatpush1.msra.mxu0 0.0
    %573 = vmatprep.subr.mxu0 0.0
    %574 = vmatpush1.msra.mxu0 0.0
    %575 = vmatprep.subr.mxu0 0.0
    %576 = vmatpush1.msra.mxu0 0.0
    %577 = vmatprep.subr.mxu0 0.0
    %578 = vmatpush1.msra.mxu0 0.0
    %579 = vmatprep.subr.mxu0 0.0
    %580 = vmatpush1.msra.mxu0 0.0
    %581 = vmatprep.subr.mxu0 0.0
    %582 = vmatpush1.msra.mxu0 0.0
    %583 = vmatprep.subr.mxu0 0.0
    %584 = vmatpush1.msra.mxu0 0.0
    %585 = vmatprep.subr.mxu0 0.0
    %586 = vmatpush1.msra.mxu0 0.0
    %587 = vmatprep.subr.mxu0 0.0
    %588 = vmatpush1.msra.mxu0 0.0
    %589 = vmatprep.subr.mxu0 0.0
    %590 = vmatpush1.msra.mxu0 0.0
    %591 = vmatprep.subr.mxu0 0.0
    %592 = vmatpush1.msra.mxu0 0.0
    %593 = vmatprep.subr.mxu0 0.0
    %594 = vmatpush1.msra.mxu0 0.0
    %595 = vmatprep.subr.mxu0 0.0
    %596 = vmatpush1.msra.mxu0 0.0
    %597 = vmatprep.subr.mxu0 0.0
    %598 = vmatpush1.msra.mxu0 0.0
    %599 = vmatprep.subr.mxu0 0.0
    %600 = vmatpush1.msra.mxu0 0.0
    %601 = vmatprep.subr.mxu0 0.0
    %602 = vmatpush1.msra.mxu0 0.0
    %603 = vmatprep.subr.mxu0 0.0
    %604 = vmatpush1.msra.mxu0 0.0
    %605 = vmatprep.subr.mxu0 0.0
    %606 = vmatpush1.msra.mxu0 0.0
    %607 = vmatprep.subr.mxu0 0.0
    %608 = vmatpush1.msra.mxu0 0.0
    %609 = vmatprep.subr.mxu0 0.0
    %610 = vmatpush1.msra.mxu0 0.0
    %611 = vmatprep.subr.mxu0 0.0
    %612 = vmatpush1.msra.mxu0 0.0
    %613 = vmatprep.subr.mxu0 0.0
    %614 = vmatpush1.msra.mxu0 0.0
    %615 = vmatprep.subr.mxu0 0.0
    %616 = vmatpush1.msra.mxu0 0.0
    %617 = vmatprep.subr.mxu0 0.0
    %618 = vmatpush1.msra.mxu0 0.0
    %619 = vmatprep.mubr.f32.mxu0 0.0
    %620 = vmatmul.mubr.f32.gmra.mrb[0].mxu0 %v553
    %v621 = vpop.f32.mrb[0].mxu0
    %v622 = vadd.f32 0.0, %v621
    %v623 = vpop.f32.mrb[0].mxu0
    %624 = vdwg.mxu0
    %v626 = vrot.slane %v622, 6
    %v627 = vrot.slane %v622, 7
    %v628 = vrot.slane %v622, 1
    %v633 = vadd.f32 %v122, %v626
    %v634 = vadd.f32 %v127, %v627
    %v635 = vadd.f32 %v132, %v622
    %v636 = vadd.f32 %v137, %v628
    %v637 = vtanh.pop %v633
    %v638 = vtanh.pop %v634
    %v639 = vtanh.pop %v635
    %v640 = vtanh.pop %v636
    %v645 = vrot.slane %v539, 6
    %v646 = vrot.slane %v540, 5
    %v647 = vsel %vm337, %v646, %v645
    %v648 = vrot.slane %v541, 4
    %v649 = vsel %vm340, %v648, %v647
    %v650 = vrot.slane %v542, 3
    %v651 = vsel %vm343, %v650, %v649
    %652 = vrot.lane.b32.xlu0 %v651, 96
    %v653 = vpop.permute.xlu0 %652
    %v654 = vsel %vm42, %v653, 0
    %656 = vmatprep.subr.mxu0 0.0
    %657 = vmatpush1.msra.mxu0 %v144
    %658 = vmatprep.subr.mxu0 0.0
    %659 = vmatpush1.msra.mxu0 %v145
    %660 = vmatprep.subr.mxu0 0.0
    %661 = vmatpush1.msra.mxu0 %v146
    %662 = vmatprep.subr.mxu0 0.0
    %663 = vmatpush1.msra.mxu0 %v147
    %664 = vmatprep.subr.mxu0 0.0
    %665 = vmatpush1.msra.mxu0 0.0
    %666 = vmatprep.subr.mxu0 0.0
    %667 = vmatpush1.msra.mxu0 0.0
    %668 = vmatprep.subr.mxu0 0.0
    %669 = vmatpush1.msra.mxu0 0.0
    %670 = vmatprep.subr.mxu0 0.0
    %671 = vmatpush1.msra.mxu0 0.0
    %672 = vmatprep.subr.mxu0 0.0
    %673 = vmatpush1.msra.mxu0 0.0
    %674 = vmatprep.subr.mxu0 0.0
    %675 = vmatpush1.msra.mxu0 0.0
    %676 = vmatprep.subr.mxu0 0.0
    %677 = vmatpush1.msra.mxu0 0.0
    %678 = vmatprep.subr.mxu0 0.0
    %679 = vmatpush1.msra.mxu0 0.0
    %680 = vmatprep.subr.mxu0 0.0
    %681 = vmatpush1.msra.mxu0 0.0
    %682 = vmatprep.subr.mxu0 0.0
    %683 = vmatpush1.msra.mxu0 0.0
    %684 = vmatprep.subr.mxu0 0.0
    %685 = vmatpush1.msra.mxu0 0.0
    %686 = vmatprep.subr.mxu0 0.0
    %687 = vmatpush1.msra.mxu0 0.0
    %688 = vmatprep.subr.mxu0 0.0
    %689 = vmatpush1.msra.mxu0 0.0
    %690 = vmatprep.subr.mxu0 0.0
    %691 = vmatpush1.msra.mxu0 0.0
    %692 = vmatprep.subr.mxu0 0.0
    %693 = vmatpush1.msra.mxu0 0.0
    %694 = vmatprep.subr.mxu0 0.0
    %695 = vmatpush1.msra.mxu0 0.0
    %696 = vmatprep.subr.mxu0 0.0
    %697 = vmatpush1.msra.mxu0 0.0
    %698 = vmatprep.subr.mxu0 0.0
    %699 = vmatpush1.msra.mxu0 0.0
    %700 = vmatprep.subr.mxu0 0.0
    %701 = vmatpush1.msra.mxu0 0.0
    %702 = vmatprep.subr.mxu0 0.0
    %703 = vmatpush1.msra.mxu0 0.0
    %704 = vmatprep.subr.mxu0 0.0
    %705 = vmatpush1.msra.mxu0 0.0
    %706 = vmatprep.subr.mxu0 0.0
    %707 = vmatpush1.msra.mxu0 0.0
    %708 = vmatprep.subr.mxu0 0.0
    %709 = vmatpush1.msra.mxu0 0.0
    %710 = vmatprep.subr.mxu0 0.0
    %711 = vmatpush1.msra.mxu0 0.0
    %712 = vmatprep.subr.mxu0 0.0
    %713 = vmatpush1.msra.mxu0 0.0
    %714 = vmatprep.subr.mxu0 0.0
    %715 = vmatpush1.msra.mxu0 0.0
    %716 = vmatprep.subr.mxu0 0.0
    %717 = vmatpush1.msra.mxu0 0.0
    %718 = vmatprep.subr.mxu0 0.0
    %719 = vmatpush1.msra.mxu0 0.0
    %720 = vmatprep.mubr.f32.mxu0 0.0
    %721 = vmatmul.mubr.f32.gmra.mrb[0].mxu0 %v654
    %v722 = vpop.f32.mrb[0].mxu0
    %v723 = vadd.f32 0.0, %v722
    %v724 = vpop.f32.mrb[0].mxu0
    %725 = vdwg.mxu0
    %v727 = vrot.slane %v723, 3
    %v728 = vrot.slane %v723, 4
    %v729 = vrot.slane %v723, 5
    %v730 = vrot.slane %v723, 6
    %731 = vrot.lane.b32.xlu0 %v727, 32
    %v732 = vpop.permute.xlu0 %731
    %733 = vrot.lane.b32.xlu0 %v728, 32
    %v734 = vpop.permute.xlu0 %733
    %735 = vrot.lane.b32.xlu0 %v729, 32
    %v736 = vpop.permute.xlu0 %735
    %737 = vrot.lane.b32.xlu0 %v730, 32
    %v738 = vpop.permute.xlu0 %737
    %v743 = vadd.f32 %v122, %v732
    %v744 = vadd.f32 %v127, %v734
    %v745 = vadd.f32 %v132, %v736
    %v746 = vadd.f32 %v137, %v738
    %v747 = vtanh.pop %v743
    %v748 = vtanh.pop %v744
    %v749 = vtanh.pop %v745
    %v750 = vtanh.pop %v746
    %v755 = vrot.slane %v637, 2
    %v756 = vrot.slane %v638, 1
    %v757 = vsel %vm337, %v756, %v755
    %v758 = vsel %vm340, %v639, %v757
    %v759 = vrot.slane %v640, 7
    %v760 = vsel %vm343, %v759, %v758
    %v761 = vsel %vm42, %v760, 0
    %763 = vmatprep.subr.mxu0 0.0
    %764 = vmatpush1.msra.mxu0 %v140
    %765 = vmatprep.subr.mxu0 0.0
    %766 = vmatpush1.msra.mxu0 %v141
    %767 = vmatprep.subr.mxu0 0.0
    %768 = vmatpush1.msra.mxu0 %v142
    %769 = vmatprep.subr.mxu0 0.0
    %770 = vmatpush1.msra.mxu0 %v143
    %771 = vmatprep.subr.mxu0 0.0
    %772 = vmatpush1.msra.mxu0 0.0
    %773 = vmatprep.subr.mxu0 0.0
    %774 = vmatpush1.msra.mxu0 0.0
    %775 = vmatprep.subr.mxu0 0.0
    %776 = vmatpush1.msra.mxu0 0.0
    %777 = vmatprep.subr.mxu0 0.0
    %778 = vmatpush1.msra.mxu0 0.0
    %779 = vmatprep.subr.mxu0 0.0
    %780 = vmatpush1.msra.mxu0 0.0
    %781 = vmatprep.subr.mxu0 0.0
    %782 = vmatpush1.msra.mxu0 0.0
    %783 = vmatprep.subr.mxu0 0.0
    %784 = vmatpush1.msra.mxu0 0.0
    %785 = vmatprep.subr.mxu0 0.0
    %786 = vmatpush1.msra.mxu0 0.0
    %787 = vmatprep.subr.mxu0 0.0
    %788 = vmatpush1.msra.mxu0 0.0
    %789 = vmatprep.subr.mxu0 0.0
    %790 = vmatpush1.msra.mxu0 0.0
    %791 = vmatprep.subr.mxu0 0.0
    %792 = vmatpush1.msra.mxu0 0.0
    %793 = vmatprep.subr.mxu0 0.0
    %794 = vmatpush1.msra.mxu0 0.0
    %795 = vmatprep.subr.mxu0 0.0
    %796 = vmatpush1.msra.mxu0 0.0
    %797 = vmatprep.subr.mxu0 0.0
    %798 = vmatpush1.msra.mxu0 0.0
    %799 = vmatprep.subr.mxu0 0.0
    %800 = vmatpush1.msra.mxu0 0.0
    %801 = vmatprep.subr.mxu0 0.0
    %802 = vmatpush1.msra.mxu0 0.0
    %803 = vmatprep.subr.mxu0 0.0
    %804 = vmatpush1.msra.mxu0 0.0
    %805 = vmatprep.subr.mxu0 0.0
    %806 = vmatpush1.msra.mxu0 0.0
    %807 = vmatprep.subr.mxu0 0.0
    %808 = vmatpush1.msra.mxu0 0.0
    %809 = vmatprep.subr.mxu0 0.0
    %810 = vmatpush1.msra.mxu0 0.0
    %811 = vmatprep.subr.mxu0 0.0
    %812 = vmatpush1.msra.mxu0 0.0
    %813 = vmatprep.subr.mxu0 0.0
    %814 = vmatpush1.msra.mxu0 0.0
    %815 = vmatprep.subr.mxu0 0.0
    %816 = vmatpush1.msra.mxu0 0.0
    %817 = vmatprep.subr.mxu0 0.0
    %818 = vmatpush1.msra.mxu0 0.0
    %819 = vmatprep.subr.mxu0 0.0
    %820 = vmatpush1.msra.mxu0 0.0
    %821 = vmatprep.subr.mxu0 0.0
    %822 = vmatpush1.msra.mxu0 0.0
    %823 = vmatprep.subr.mxu0 0.0
    %824 = vmatpush1.msra.mxu0 0.0
    %825 = vmatprep.subr.mxu0 0.0
    %826 = vmatpush1.msra.mxu0 0.0
    %827 = vmatprep.mubr.f32.mxu0 0.0
    %828 = vmatmul.mubr.f32.gmra.mrb[0].mxu0 %v761
    %v829 = vpop.f32.mrb[0].mxu0
    %v830 = vadd.f32 0.0, %v829
    %v831 = vpop.f32.mrb[0].mxu0
    %832 = vdwg.mxu0
    %v834 = vrot.slane %v830, 5
    %v835 = vrot.slane %v830, 6
    %v836 = vrot.slane %v830, 7
    %v841 = vadd.f32 %v122, %v834
    %v842 = vadd.f32 %v127, %v835
    %v843 = vadd.f32 %v132, %v836
    %v844 = vadd.f32 %v137, %v830
    %v845 = vtanh.pop %v841
    %v846 = vtanh.pop %v842
    %v847 = vtanh.pop %v843
    %v848 = vtanh.pop %v844
    %v853 = vrot.slane %v747, 5
    %v854 = vrot.slane %v748, 4
    %v855 = vsel %vm337, %v854, %v853
    %v856 = vrot.slane %v749, 3
    %v857 = vsel %vm340, %v856, %v855
    %v858 = vrot.slane %v750, 2
    %v859 = vsel %vm343, %v858, %v857
    %860 = vrot.lane.b32.xlu0 %v859, 96
    %v861 = vpop.permute.xlu0 %860
    %v862 = vsel %vm42, %v861, 0
    %864 = vmatprep.subr.mxu0 0.0
    %865 = vmatpush1.msra.mxu0 %v144
    %866 = vmatprep.subr.mxu0 0.0
    %867 = vmatpush1.msra.mxu0 %v145
    %868 = vmatprep.subr.mxu0 0.0
    %869 = vmatpush1.msra.mxu0 %v146
    %870 = vmatprep.subr.mxu0 0.0
    %871 = vmatpush1.msra.mxu0 %v147
    %872 = vmatprep.subr.mxu0 0.0
    %873 = vmatpush1.msra.mxu0 0.0
    %874 = vmatprep.subr.mxu0 0.0
    %875 = vmatpush1.msra.mxu0 0.0
    %876 = vmatprep.subr.mxu0 0.0
    %877 = vmatpush1.msra.mxu0 0.0
    %878 = vmatprep.subr.mxu0 0.0
    %879 = vmatpush1.msra.mxu0 0.0
    %880 = vmatprep.subr.mxu0 0.0
    %881 = vmatpush1.msra.mxu0 0.0
    %882 = vmatprep.subr.mxu0 0.0
    %883 = vmatpush1.msra.mxu0 0.0
    %884 = vmatprep.subr.mxu0 0.0
    %885 = vmatpush1.msra.mxu0 0.0
    %886 = vmatprep.subr.mxu0 0.0
    %887 = vmatpush1.msra.mxu0 0.0
    %888 = vmatprep.subr.mxu0 0.0
    %889 = vmatpush1.msra.mxu0 0.0
    %890 = vmatprep.subr.mxu0 0.0
    %891 = vmatpush1.msra.mxu0 0.0
    %892 = vmatprep.subr.mxu0 0.0
    %893 = vmatpush1.msra.mxu0 0.0
    %894 = vmatprep.subr.mxu0 0.0
    %895 = vmatpush1.msra.mxu0 0.0
    %896 = vmatprep.subr.mxu0 0.0
    %897 = vmatpush1.msra.mxu0 0.0
    %898 = vmatprep.subr.mxu0 0.0
    %899 = vmatpush1.msra.mxu0 0.0
    %900 = vmatprep.subr.mxu0 0.0
    %901 = vmatpush1.msra.mxu0 0.0
    %902 = vmatprep.subr.mxu0 0.0
    %903 = vmatpush1.msra.mxu0 0.0
    %904 = vmatprep.subr.mxu0 0.0
    %905 = vmatpush1.msra.mxu0 0.0
    %906 = vmatprep.subr.mxu0 0.0
    %907 = vmatpush1.msra.mxu0 0.0
    %908 = vmatprep.subr.mxu0 0.0
    %909 = vmatpush1.msra.mxu0 0.0
    %910 = vmatprep.subr.mxu0 0.0
    %911 = vmatpush1.msra.mxu0 0.0
    %912 = vmatprep.subr.mxu0 0.0
    %913 = vmatpush1.msra.mxu0 0.0
    %914 = vmatprep.subr.mxu0 0.0
    %915 = vmatpush1.msra.mxu0 0.0
    %916 = vmatprep.subr.mxu0 0.0
    %917 = vmatpush1.msra.mxu0 0.0
    %918 = vmatprep.subr.mxu0 0.0
    %919 = vmatpush1.msra.mxu0 0.0
    %920 = vmatprep.subr.mxu0 0.0
    %921 = vmatpush1.msra.mxu0 0.0
    %922 = vmatprep.subr.mxu0 0.0
    %923 = vmatpush1.msra.mxu0 0.0
    %924 = vmatprep.subr.mxu0 0.0
    %925 = vmatpush1.msra.mxu0 0.0
    %926 = vmatprep.subr.mxu0 0.0
    %927 = vmatpush1.msra.mxu0 0.0
    %928 = vmatprep.mubr.f32.mxu0 0.0
    %929 = vmatmul.mubr.f32.gmra.mrb[0].mxu0 %v862
    %v930 = vpop.f32.mrb[0].mxu0
    %v931 = vadd.f32 0.0, %v930
    %v932 = vpop.f32.mrb[0].mxu0
    %933 = vdwg.mxu0
    %v935 = vrot.slane %v931, 4
    %v936 = vrot.slane %v931, 5
    %v937 = vrot.slane %v931, 6
    %v938 = vrot.slane %v931, 7
    %939 = vrot.lane.b32.xlu0 %v935, 32
    %v940 = vpop.permute.xlu0 %939
    %941 = vrot.lane.b32.xlu0 %v936, 32
    %v942 = vpop.permute.xlu0 %941
    %943 = vrot.lane.b32.xlu0 %v937, 32
    %v944 = vpop.permute.xlu0 %943
    %945 = vrot.lane.b32.xlu0 %v938, 32
    %v946 = vpop.permute.xlu0 %945
    %v951 = vadd.f32 %v122, %v940
    %v952 = vadd.f32 %v127, %v942
    %v953 = vadd.f32 %v132, %v944
    %v954 = vadd.f32 %v137, %v946
    %v955 = vtanh.pop %v951
    %v956 = vtanh.pop %v952
    %v957 = vtanh.pop %v953
    %v958 = vtanh.pop %v954
    %v963 = vrot.slane %v845, 3
    %v964 = vrot.slane %v846, 2
    %v965 = vsel %vm337, %v964, %v963
    %v966 = vrot.slane %v847, 1
    %v967 = vsel %vm340, %v966, %v965
    %v968 = vsel %vm343, %v848, %v967
    %v969 = vsel %vm42, %v968, 0
    %971 = vmatprep.subr.mxu0 0.0
    %972 = vmatpush1.msra.mxu0 %v140
    %973 = vmatprep.subr.mxu0 0.0
    %974 = vmatpush1.msra.mxu0 %v141
    %975 = vmatprep.subr.mxu0 0.0
    %976 = vmatpush1.msra.mxu0 %v142
    %977 = vmatprep.subr.mxu0 0.0
    %978 = vmatpush1.msra.mxu0 %v143
    %979 = vmatprep.subr.mxu0 0.0
    %980 = vmatpush1.msra.mxu0 0.0
    %981 = vmatprep.subr.mxu0 0.0
    %982 = vmatpush1.msra.mxu0 0.0
    %983 = vmatprep.subr.mxu0 0.0
    %984 = vmatpush1.msra.mxu0 0.0
    %985 = vmatprep.subr.mxu0 0.0
    %986 = vmatpush1.msra.mxu0 0.0
    %987 = vmatprep.subr.mxu0 0.0
    %988 = vmatpush1.msra.mxu0 0.0
    %989 = vmatprep.subr.mxu0 0.0
    %990 = vmatpush1.msra.mxu0 0.0
    %991 = vmatprep.subr.mxu0 0.0
    %992 = vmatpush1.msra.mxu0 0.0
    %993 = vmatprep.subr.mxu0 0.0
    %994 = vmatpush1.msra.mxu0 0.0
    %995 = vmatprep.subr.mxu0 0.0
    %996 = vmatpush1.msra.mxu0 0.0
    %997 = vmatprep.subr.mxu0 0.0
    %998 = vmatpush1.msra.mxu0 0.0
    %999 = vmatprep.subr.mxu0 0.0
    %1000 = vmatpush1.msra.mxu0 0.0
    %1001 = vmatprep.subr.mxu0 0.0
    %1002 = vmatpush1.msra.mxu0 0.0
    %1003 = vmatprep.subr.mxu0 0.0
    %1004 = vmatpush1.msra.mxu0 0.0
    %1005 = vmatprep.subr.mxu0 0.0
    %1006 = vmatpush1.msra.mxu0 0.0
    %1007 = vmatprep.subr.mxu0 0.0
    %1008 = vmatpush1.msra.mxu0 0.0
    %1009 = vmatprep.subr.mxu0 0.0
    %1010 = vmatpush1.msra.mxu0 0.0
    %1011 = vmatprep.subr.mxu0 0.0
    %1012 = vmatpush1.msra.mxu0 0.0
    %1013 = vmatprep.subr.mxu0 0.0
    %1014 = vmatpush1.msra.mxu0 0.0
    %1015 = vmatprep.subr.mxu0 0.0
    %1016 = vmatpush1.msra.mxu0 0.0
    %1017 = vmatprep.subr.mxu0 0.0
    %1018 = vmatpush1.msra.mxu0 0.0
    %1019 = vmatprep.subr.mxu0 0.0
    %1020 = vmatpush1.msra.mxu0 0.0
    %1021 = vmatprep.subr.mxu0 0.0
    %1022 = vmatpush1.msra.mxu0 0.0
    %1023 = vmatprep.subr.mxu0 0.0
    %1024 = vmatpush1.msra.mxu0 0.0
    %1025 = vmatprep.subr.mxu0 0.0
    %1026 = vmatpush1.msra.mxu0 0.0
    %1027 = vmatprep.subr.mxu0 0.0
    %1028 = vmatpush1.msra.mxu0 0.0
    %1029 = vmatprep.subr.mxu0 0.0
    %1030 = vmatpush1.msra.mxu0 0.0
    %1031 = vmatprep.subr.mxu0 0.0
    %1032 = vmatpush1.msra.mxu0 0.0
    %1033 = vmatprep.subr.mxu0 0.0
    %1034 = vmatpush1.msra.mxu0 0.0
    %1035 = vmatprep.mubr.f32.mxu0 0.0
    %1036 = vmatmul.mubr.f32.gmra.mrb[0].mxu0 %v969
    %v1037 = vpop.f32.mrb[0].mxu0
    %v1038 = vadd.f32 0.0, %v1037
    %v1039 = vpop.f32.mrb[0].mxu0
    %1040 = vdwg.mxu0
    %v1042 = vrot.slane %v1038, 4
    %v1043 = vrot.slane %v1038, 5
    %v1044 = vrot.slane %v1038, 6
    %v1045 = vrot.slane %v1038, 7
    %v1050 = vadd.f32 %v122, %v1042
    %v1051 = vadd.f32 %v127, %v1043
    %v1052 = vadd.f32 %v132, %v1044
    %v1053 = vadd.f32 %v137, %v1045
    %v1054 = vtanh.pop %v1050
    %v1055 = vtanh.pop %v1051
    %v1056 = vtanh.pop %v1052
    %v1057 = vtanh.pop %v1053
    %v1062 = vrot.slane %v955, 4
    %v1063 = vrot.slane %v956, 3
    %v1064 = vsel %vm337, %v1063, %v1062
    %v1065 = vrot.slane %v957, 2
    %v1066 = vsel %vm340, %v1065, %v1064
    %v1067 = vrot.slane %v958, 1
    %v1068 = vsel %vm343, %v1067, %v1066
    %1069 = vrot.lane.b32.xlu0 %v1068, 96
    %v1070 = vpop.permute.xlu0 %1069
    %v1071 = vsel %vm42, %v1070, 0
    %1073 = vmatprep.subr.mxu0 0.0
    %1074 = vmatpush1.msra.mxu0 %v144
    %1075 = vmatprep.subr.mxu0 0.0
    %1076 = vmatpush1.msra.mxu0 %v145
    %1077 = vmatprep.subr.mxu0 0.0
    %1078 = vmatpush1.msra.mxu0 %v146
    %1079 = vmatprep.subr.mxu0 0.0
    %1080 = vmatpush1.msra.mxu0 %v147
    %1081 = vmatprep.subr.mxu0 0.0
    %1082 = vmatpush1.msra.mxu0 0.0
    %1083 = vmatprep.subr.mxu0 0.0
    %1084 = vmatpush1.msra.mxu0 0.0
    %1085 = vmatprep.subr.mxu0 0.0
    %1086 = vmatpush1.msra.mxu0 0.0
    %1087 = vmatprep.subr.mxu0 0.0
    %1088 = vmatpush1.msra.mxu0 0.0
    %1089 = vmatprep.subr.mxu0 0.0
    %1090 = vmatpush1.msra.mxu0 0.0
    %1091 = vmatprep.subr.mxu0 0.0
    %1092 = vmatpush1.msra.mxu0 0.0
    %1093 = vmatprep.subr.mxu0 0.0
    %1094 = vmatpush1.msra.mxu0 0.0
    %1095 = vmatprep.subr.mxu0 0.0
    %1096 = vmatpush1.msra.mxu0 0.0
    %1097 = vmatprep.subr.mxu0 0.0
    %1098 = vmatpush1.msra.mxu0 0.0
    %1099 = vmatprep.subr.mxu0 0.0
    %1100 = vmatpush1.msra.mxu0 0.0
    %1101 = vmatprep.subr.mxu0 0.0
    %1102 = vmatpush1.msra.mxu0 0.0
    %1103 = vmatprep.subr.mxu0 0.0
    %1104 = vmatpush1.msra.mxu0 0.0
    %1105 = vmatprep.subr.mxu0 0.0
    %1106 = vmatpush1.msra.mxu0 0.0
    %1107 = vmatprep.subr.mxu0 0.0
    %1108 = vmatpush1.msra.mxu0 0.0
    %1109 = vmatprep.subr.mxu0 0.0
    %1110 = vmatpush1.msra.mxu0 0.0
    %1111 = vmatprep.subr.mxu0 0.0
    %1112 = vmatpush1.msra.mxu0 0.0
    %1113 = vmatprep.subr.mxu0 0.0
    %1114 = vmatpush1.msra.mxu0 0.0
    %1115 = vmatprep.subr.mxu0 0.0
    %1116 = vmatpush1.msra.mxu0 0.0
    %1117 = vmatprep.subr.mxu0 0.0
    %1118 = vmatpush1.msra.mxu0 0.0
    %1119 = vmatprep.subr.mxu0 0.0
    %1120 = vmatpush1.msra.mxu0 0.0
    %1121 = vmatprep.subr.mxu0 0.0
    %1122 = vmatpush1.msra.mxu0 0.0
    %1123 = vmatprep.subr.mxu0 0.0
    %1124 = vmatpush1.msra.mxu0 0.0
    %1125 = vmatprep.subr.mxu0 0.0
    %1126 = vmatpush1.msra.mxu0 0.0
    %1127 = vmatprep.subr.mxu0 0.0
    %1128 = vmatpush1.msra.mxu0 0.0
    %1129 = vmatprep.subr.mxu0 0.0
    %1130 = vmatpush1.msra.mxu0 0.0
    %1131 = vmatprep.subr.mxu0 0.0
    %1132 = vmatpush1.msra.mxu0 0.0
    %1133 = vmatprep.subr.mxu0 0.0
    %1134 = vmatpush1.msra.mxu0 0.0
    %1135 = vmatprep.subr.mxu0 0.0
    %1136 = vmatpush1.msra.mxu0 0.0
    %1137 = vmatprep.mubr.f32.mxu0 0.0
    %1138 = vmatmul.mubr.f32.gmra.mrb[0].mxu0 %v1071
    %v1139 = vpop.f32.mrb[0].mxu0
    %v1140 = vadd.f32 0.0, %v1139
    %v1141 = vpop.f32.mrb[0].mxu0
    %1142 = vdwg.mxu0
    %v1144 = vrot.slane %v1140, 5
    %v1145 = vrot.slane %v1140, 6
    %v1146 = vrot.slane %v1140, 7
    %1147 = vrot.lane.b32.xlu0 %v1144, 32
    %v1148 = vpop.permute.xlu0 %1147
    %1149 = vrot.lane.b32.xlu0 %v1145, 32
    %v1150 = vpop.permute.xlu0 %1149
    %1151 = vrot.lane.b32.xlu0 %v1146, 32
    %v1152 = vpop.permute.xlu0 %1151
    %1153 = vrot.lane.b32.xlu0 %v1140, 32
    %v1154 = vpop.permute.xlu0 %1153
    %v1159 = vadd.f32 %v122, %v1148
    %v1160 = vadd.f32 %v127, %v1150
    %v1161 = vadd.f32 %v132, %v1152
    %v1162 = vadd.f32 %v137, %v1154
    %v1163 = vtanh.pop %v1159
    %v1164 = vtanh.pop %v1160
    %v1165 = vtanh.pop %v1161
    %v1166 = vtanh.pop %v1162
    %v1171 = vrot.slane %v1054, 4
    %v1172 = vrot.slane %v1055, 3
    %v1173 = vsel %vm337, %v1172, %v1171
    %v1174 = vrot.slane %v1056, 2
    %v1175 = vsel %vm340, %v1174, %v1173
    %v1176 = vrot.slane %v1057, 1
    %v1177 = vsel %vm343, %v1176, %v1175
    %v1178 = vsel %vm42, %v1177, 0
    %1180 = vmatprep.subr.mxu0 0.0
    %1181 = vmatpush1.msra.mxu0 %v140
    %1182 = vmatprep.subr.mxu0 0.0
    %1183 = vmatpush1.msra.mxu0 %v141
    %1184 = vmatprep.subr.mxu0 0.0
    %1185 = vmatpush1.msra.mxu0 %v142
    %1186 = vmatprep.subr.mxu0 0.0
    %1187 = vmatpush1.msra.mxu0 %v143
    %1188 = vmatprep.subr.mxu0 0.0
    %1189 = vmatpush1.msra.mxu0 0.0
    %1190 = vmatprep.subr.mxu0 0.0
    %1191 = vmatpush1.msra.mxu0 0.0
    %1192 = vmatprep.subr.mxu0 0.0
    %1193 = vmatpush1.msra.mxu0 0.0
    %1194 = vmatprep.subr.mxu0 0.0
    %1195 = vmatpush1.msra.mxu0 0.0
    %1196 = vmatprep.subr.mxu0 0.0
    %1197 = vmatpush1.msra.mxu0 0.0
    %1198 = vmatprep.subr.mxu0 0.0
    %1199 = vmatpush1.msra.mxu0 0.0
    %1200 = vmatprep.subr.mxu0 0.0
    %1201 = vmatpush1.msra.mxu0 0.0
    %1202 = vmatprep.subr.mxu0 0.0
    %1203 = vmatpush1.msra.mxu0 0.0
    %1204 = vmatprep.subr.mxu0 0.0
    %1205 = vmatpush1.msra.mxu0 0.0
    %1206 = vmatprep.subr.mxu0 0.0
    %1207 = vmatpush1.msra.mxu0 0.0
    %1208 = vmatprep.subr.mxu0 0.0
    %1209 = vmatpush1.msra.mxu0 0.0
    %1210 = vmatprep.subr.mxu0 0.0
    %1211 = vmatpush1.msra.mxu0 0.0
    %1212 = vmatprep.subr.mxu0 0.0
    %1213 = vmatpush1.msra.mxu0 0.0
    %1214 = vmatprep.subr.mxu0 0.0
    %1215 = vmatpush1.msra.mxu0 0.0
    %1216 = vmatprep.subr.mxu0 0.0
    %1217 = vmatpush1.msra.mxu0 0.0
    %1218 = vmatprep.subr.mxu0 0.0
    %1219 = vmatpush1.msra.mxu0 0.0
    %1220 = vmatprep.subr.mxu0 0.0
    %1221 = vmatpush1.msra.mxu0 0.0
    %1222 = vmatprep.subr.mxu0 0.0
    %1223 = vmatpush1.msra.mxu0 0.0
    %1224 = vmatprep.subr.mxu0 0.0
    %1225 = vmatpush1.msra.mxu0 0.0
    %1226 = vmatprep.subr.mxu0 0.0
    %1227 = vmatpush1.msra.mxu0 0.0
    %1228 = vmatprep.subr.mxu0 0.0
    %1229 = vmatpush1.msra.mxu0 0.0
    %1230 = vmatprep.subr.mxu0 0.0
    %1231 = vmatpush1.msra.mxu0 0.0
    %1232 = vmatprep.subr.mxu0 0.0
    %1233 = vmatpush1.msra.mxu0 0.0
    %1234 = vmatprep.subr.mxu0 0.0
    %1235 = vmatpush1.msra.mxu0 0.0
    %1236 = vmatprep.subr.mxu0 0.0
    %1237 = vmatpush1.msra.mxu0 0.0
    %1238 = vmatprep.subr.mxu0 0.0
    %1239 = vmatpush1.msra.mxu0 0.0
    %1240 = vmatprep.subr.mxu0 0.0
    %1241 = vmatpush1.msra.mxu0 0.0
    %1242 = vmatprep.subr.mxu0 0.0
    %1243 = vmatpush1.msra.mxu0 0.0
    %1244 = vmatprep.mubr.f32.mxu0 0.0
    %1245 = vmatmul.mubr.f32.gmra.mrb[0].mxu0 %v1178
    %v1246 = vpop.f32.mrb[0].mxu0
    %v1247 = vadd.f32 0.0, %v1246
    %v1248 = vpop.f32.mrb[0].mxu0
    %1249 = vdwg.mxu0
    %v1251 = vrot.slane %v1247, 3
    %v1252 = vrot.slane %v1247, 4
    %v1253 = vrot.slane %v1247, 5
    %v1254 = vrot.slane %v1247, 6
    %v1259 = vadd.f32 %v122, %v1251
    %v1260 = vadd.f32 %v127, %v1252
    %v1261 = vadd.f32 %v132, %v1253
    %v1262 = vadd.f32 %v137, %v1254
    %v1263 = vtanh.pop %v1259
    %v1264 = vtanh.pop %v1260
    %v1265 = vtanh.pop %v1261
    %v1266 = vtanh.pop %v1262
    %v1271 = vrot.slane %v1163, 3
    %v1272 = vrot.slane %v1164, 2
    %v1273 = vsel %vm337, %v1272, %v1271
    %v1274 = vrot.slane %v1165, 1
    %v1275 = vsel %vm340, %v1274, %v1273
    %v1276 = vsel %vm343, %v1166, %v1275
    %1277 = vrot.lane.b32.xlu0 %v1276, 96
    %v1278 = vpop.permute.xlu0 %1277
    %v1279 = vsel %vm42, %v1278, 0
    %1281 = vmatprep.subr.mxu0 0.0
    %1282 = vmatpush1.msra.mxu0 %v144
    %1283 = vmatprep.subr.mxu0 0.0
    %1284 = vmatpush1.msra.mxu0 %v145
    %1285 = vmatprep.subr.mxu0 0.0
    %1286 = vmatpush1.msra.mxu0 %v146
    %1287 = vmatprep.subr.mxu0 0.0
    %1288 = vmatpush1.msra.mxu0 %v147
    %1289 = vmatprep.subr.mxu0 0.0
    %1290 = vmatpush1.msra.mxu0 0.0
    %1291 = vmatprep.subr.mxu0 0.0
    %1292 = vmatpush1.msra.mxu0 0.0
    %1293 = vmatprep.subr.mxu0 0.0
    %1294 = vmatpush1.msra.mxu0 0.0
    %1295 = vmatprep.subr.mxu0 0.0
    %1296 = vmatpush1.msra.mxu0 0.0
    %1297 = vmatprep.subr.mxu0 0.0
    %1298 = vmatpush1.msra.mxu0 0.0
    %1299 = vmatprep.subr.mxu0 0.0
    %1300 = vmatpush1.msra.mxu0 0.0
    %1301 = vmatprep.subr.mxu0 0.0
    %1302 = vmatpush1.msra.mxu0 0.0
    %1303 = vmatprep.subr.mxu0 0.0
    %1304 = vmatpush1.msra.mxu0 0.0
    %1305 = vmatprep.subr.mxu0 0.0
    %1306 = vmatpush1.msra.mxu0 0.0
    %1307 = vmatprep.subr.mxu0 0.0
    %1308 = vmatpush1.msra.mxu0 0.0
    %1309 = vmatprep.subr.mxu0 0.0
    %1310 = vmatpush1.msra.mxu0 0.0
    %1311 = vmatprep.subr.mxu0 0.0
    %1312 = vmatpush1.msra.mxu0 0.0
    %1313 = vmatprep.subr.mxu0 0.0
    %1314 = vmatpush1.msra.mxu0 0.0
    %1315 = vmatprep.subr.mxu0 0.0
    %1316 = vmatpush1.msra.mxu0 0.0
    %1317 = vmatprep.subr.mxu0 0.0
    %1318 = vmatpush1.msra.mxu0 0.0
    %1319 = vmatprep.subr.mxu0 0.0
    %1320 = vmatpush1.msra.mxu0 0.0
    %1321 = vmatprep.subr.mxu0 0.0
    %1322 = vmatpush1.msra.mxu0 0.0
    %1323 = vmatprep.subr.mxu0 0.0
    %1324 = vmatpush1.msra.mxu0 0.0
    %1325 = vmatprep.subr.mxu0 0.0
    %1326 = vmatpush1.msra.mxu0 0.0
    %1327 = vmatprep.subr.mxu0 0.0
    %1328 = vmatpush1.msra.mxu0 0.0
    %1329 = vmatprep.subr.mxu0 0.0
    %1330 = vmatpush1.msra.mxu0 0.0
    %1331 = vmatprep.subr.mxu0 0.0
    %1332 = vmatpush1.msra.mxu0 0.0
    %1333 = vmatprep.subr.mxu0 0.0
    %1334 = vmatpush1.msra.mxu0 0.0
    %1335 = vmatprep.subr.mxu0 0.0
    %1336 = vmatpush1.msra.mxu0 0.0
    %1337 = vmatprep.subr.mxu0 0.0
    %1338 = vmatpush1.msra.mxu0 0.0
    %1339 = vmatprep.subr.mxu0 0.0
    %1340 = vmatpush1.msra.mxu0 0.0
    %1341 = vmatprep.subr.mxu0 0.0
    %1342 = vmatpush1.msra.mxu0 0.0
    %1343 = vmatprep.subr.mxu0 0.0
    %1344 = vmatpush1.msra.mxu0 0.0
    %1345 = vmatprep.mubr.f32.mxu0 0.0
    %1346 = vmatmul.mubr.f32.gmra.mrb[0].mxu0 %v1279
    %v1347 = vpop.f32.mrb[0].mxu0
    %v1348 = vadd.f32 0.0, %v1347
    %v1349 = vpop.f32.mrb[0].mxu0
    %1350 = vdwg.mxu0
    %v1352 = vrot.slane %v1348, 6
    %v1353 = vrot.slane %v1348, 7
    %v1354 = vrot.slane %v1348, 1
    %1355 = vrot.lane.b32.xlu0 %v1352, 32
    %v1356 = vpop.permute.xlu0 %1355
    %1357 = vrot.lane.b32.xlu0 %v1353, 32
    %v1358 = vpop.permute.xlu0 %1357
    %1359 = vrot.lane.b32.xlu0 %v1348, 32
    %v1360 = vpop.permute.xlu0 %1359
    %1361 = vrot.lane.b32.xlu0 %v1354, 32
    %v1362 = vpop.permute.xlu0 %1361
    %v1367 = vadd.f32 %v122, %v1356
    %v1368 = vadd.f32 %v127, %v1358
    %v1369 = vadd.f32 %v132, %v1360
    %v1370 = vadd.f32 %v137, %v1362
    %v1371 = vtanh.pop %v1367
    %v1372 = vtanh.pop %v1368
    %v1373 = vtanh.pop %v1369
    %v1374 = vtanh.pop %v1370
    %v1379 = vrot.slane %v1263, 5
    %v1380 = vrot.slane %v1264, 4
    %v1381 = vsel %vm337, %v1380, %v1379
    %v1382 = vrot.slane %v1265, 3
    %v1383 = vsel %vm340, %v1382, %v1381
    %v1384 = vrot.slane %v1266, 2
    %v1385 = vsel %vm343, %v1384, %v1383
    %v1386 = vsel %vm42, %v1385, 0
    %1388 = vmatprep.subr.mxu0 0.0
    %1389 = vmatpush1.msra.mxu0 %v140
    %1390 = vmatprep.subr.mxu0 0.0
    %1391 = vmatpush1.msra.mxu0 %v141
    %1392 = vmatprep.subr.mxu0 0.0
    %1393 = vmatpush1.msra.mxu0 %v142
    %1394 = vmatprep.subr.mxu0 0.0
    %1395 = vmatpush1.msra.mxu0 %v143
    %1396 = vmatprep.subr.mxu0 0.0
    %1397 = vmatpush1.msra.mxu0 0.0
    %1398 = vmatprep.subr.mxu0 0.0
    %1399 = vmatpush1.msra.mxu0 0.0
    %1400 = vmatprep.subr.mxu0 0.0
    %1401 = vmatpush1.msra.mxu0 0.0
    %1402 = vmatprep.subr.mxu0 0.0
    %1403 = vmatpush1.msra.mxu0 0.0
    %1404 = vmatprep.subr.mxu0 0.0
    %1405 = vmatpush1.msra.mxu0 0.0
    %1406 = vmatprep.subr.mxu0 0.0
    %1407 = vmatpush1.msra.mxu0 0.0
    %1408 = vmatprep.subr.mxu0 0.0
    %1409 = vmatpush1.msra.mxu0 0.0
    %1410 = vmatprep.subr.mxu0 0.0
    %1411 = vmatpush1.msra.mxu0 0.0
    %1412 = vmatprep.subr.mxu0 0.0
    %1413 = vmatpush1.msra.mxu0 0.0
    %1414 = vmatprep.subr.mxu0 0.0
    %1415 = vmatpush1.msra.mxu0 0.0
    %1416 = vmatprep.subr.mxu0 0.0
    %1417 = vmatpush1.msra.mxu0 0.0
    %1418 = vmatprep.subr.mxu0 0.0
    %1419 = vmatpush1.msra.mxu0 0.0
    %1420 = vmatprep.subr.mxu0 0.0
    %1421 = vmatpush1.msra.mxu0 0.0
    %1422 = vmatprep.subr.mxu0 0.0
    %1423 = vmatpush1.msra.mxu0 0.0
    %1424 = vmatprep.subr.mxu0 0.0
    %1425 = vmatpush1.msra.mxu0 0.0
    %1426 = vmatprep.subr.mxu0 0.0
    %1427 = vmatpush1.msra.mxu0 0.0
    %1428 = vmatprep.subr.mxu0 0.0
    %1429 = vmatpush1.msra.mxu0 0.0
    %1430 = vmatprep.subr.mxu0 0.0
    %1431 = vmatpush1.msra.mxu0 0.0
    %1432 = vmatprep.subr.mxu0 0.0
    %1433 = vmatpush1.msra.mxu0 0.0
    %1434 = vmatprep.subr.mxu0 0.0
    %1435 = vmatpush1.msra.mxu0 0.0
    %1436 = vmatprep.subr.mxu0 0.0
    %1437 = vmatpush1.msra.mxu0 0.0
    %1438 = vmatprep.subr.mxu0 0.0
    %1439 = vmatpush1.msra.mxu0 0.0
    %1440 = vmatprep.subr.mxu0 0.0
    %1441 = vmatpush1.msra.mxu0 0.0
    %1442 = vmatprep.subr.mxu0 0.0
    %1443 = vmatpush1.msra.mxu0 0.0
    %1444 = vmatprep.subr.mxu0 0.0
    %1445 = vmatpush1.msra.mxu0 0.0
    %1446 = vmatprep.subr.mxu0 0.0
    %1447 = vmatpush1.msra.mxu0 0.0
    %1448 = vmatprep.subr.mxu0 0.0
    %1449 = vmatpush1.msra.mxu0 0.0
    %1450 = vmatprep.subr.mxu0 0.0
    %1451 = vmatpush1.msra.mxu0 0.0
    %1452 = vmatprep.mubr.f32.mxu0 0.0
    %1453 = vmatmul.mubr.f32.gmra.mrb[0].mxu0 %v1386
    %v1454 = vpop.f32.mrb[0].mxu0
    %v1455 = vadd.f32 0.0, %v1454
    %v1456 = vpop.f32.mrb[0].mxu0
    %1457 = vdwg.mxu0
    %v1459 = vrot.slane %v1455, 2
    %v1460 = vrot.slane %v1455, 3
    %v1461 = vrot.slane %v1455, 4
    %v1462 = vrot.slane %v1455, 5
    %v1467 = vadd.f32 %v122, %v1459
    %v1468 = vadd.f32 %v127, %v1460
    %v1469 = vadd.f32 %v132, %v1461
    %v1470 = vadd.f32 %v137, %v1462
    %v1471 = vtanh.pop %v1467
    %v1472 = vtanh.pop %v1468
    %v1473 = vtanh.pop %v1469
    %v1474 = vtanh.pop %v1470
    %v1479 = vrot.slane %v1371, 2
    %v1480 = vrot.slane %v1372, 1
    %v1481 = vsel %vm337, %v1480, %v1479
    %v1482 = vsel %vm340, %v1373, %v1481
    %v1483 = vrot.slane %v1374, 7
    %v1484 = vsel %vm343, %v1483, %v1482
    %1485 = vrot.lane.b32.xlu0 %v1484, 96
    %v1486 = vpop.permute.xlu0 %1485
    %v1487 = vsel %vm42, %v1486, 0
    %1489 = vmatprep.subr.mxu0 0.0
    %1490 = vmatpush1.msra.mxu0 %v144
    %1491 = vmatprep.subr.mxu0 0.0
    %1492 = vmatpush1.msra.mxu0 %v145
    %1493 = vmatprep.subr.mxu0 0.0
    %1494 = vmatpush1.msra.mxu0 %v146
    %1495 = vmatprep.subr.mxu0 0.0
    %1496 = vmatpush1.msra.mxu0 %v147
    %1497 = vmatprep.subr.mxu0 0.0
    %1498 = vmatpush1.msra.mxu0 0.0
    %1499 = vmatprep.subr.mxu0 0.0
    %1500 = vmatpush1.msra.mxu0 0.0
    %1501 = vmatprep.subr.mxu0 0.0
    %1502 = vmatpush1.msra.mxu0 0.0
    %1503 = vmatprep.subr.mxu0 0.0
    %1504 = vmatpush1.msra.mxu0 0.0
    %1505 = vmatprep.subr.mxu0 0.0
    %1506 = vmatpush1.msra.mxu0 0.0
    %1507 = vmatprep.subr.mxu0 0.0
    %1508 = vmatpush1.msra.mxu0 0.0
    %1509 = vmatprep.subr.mxu0 0.0
    %1510 = vmatpush1.msra.mxu0 0.0
    %1511 = vmatprep.subr.mxu0 0.0
    %1512 = vmatpush1.msra.mxu0 0.0
    %1513 = vmatprep.subr.mxu0 0.0
    %1514 = vmatpush1.msra.mxu0 0.0
    %1515 = vmatprep.subr.mxu0 0.0
    %1516 = vmatpush1.msra.mxu0 0.0
    %1517 = vmatprep.subr.mxu0 0.0
    %1518 = vmatpush1.msra.mxu0 0.0
    %1519 = vmatprep.subr.mxu0 0.0
    %1520 = vmatpush1.msra.mxu0 0.0
    %1521 = vmatprep.subr.mxu0 0.0
    %1522 = vmatpush1.msra.mxu0 0.0
    %1523 = vmatprep.subr.mxu0 0.0
    %1524 = vmatpush1.msra.mxu0 0.0
    %1525 = vmatprep.subr.mxu0 0.0
    %1526 = vmatpush1.msra.mxu0 0.0
    %1527 = vmatprep.subr.mxu0 0.0
    %1528 = vmatpush1.msra.mxu0 0.0
    %1529 = vmatprep.subr.mxu0 0.0
    %1530 = vmatpush1.msra.mxu0 0.0
    %1531 = vmatprep.subr.mxu0 0.0
    %1532 = vmatpush1.msra.mxu0 0.0
    %1533 = vmatprep.subr.mxu0 0.0
    %1534 = vmatpush1.msra.mxu0 0.0
    %1535 = vmatprep.subr.mxu0 0.0
    %1536 = vmatpush1.msra.mxu0 0.0
    %1537 = vmatprep.subr.mxu0 0.0
    %1538 = vmatpush1.msra.mxu0 0.0
    %1539 = vmatprep.subr.mxu0 0.0
    %1540 = vmatpush1.msra.mxu0 0.0
    %1541 = vmatprep.subr.mxu0 0.0
    %1542 = vmatpush1.msra.mxu0 0.0
    %1543 = vmatprep.subr.mxu0 0.0
    %1544 = vmatpush1.msra.mxu0 0.0
    %1545 = vmatprep.subr.mxu0 0.0
    %1546 = vmatpush1.msra.mxu0 0.0
    %1547 = vmatprep.subr.mxu0 0.0
    %1548 = vmatpush1.msra.mxu0 0.0
    %1549 = vmatprep.subr.mxu0 0.0
    %1550 = vmatpush1.msra.mxu0 0.0
    %1551 = vmatprep.subr.mxu0 0.0
    %1552 = vmatpush1.msra.mxu0 0.0
    %1553 = vmatprep.mubr.f32.mxu0 0.0
    %1554 = vmatmul.mubr.f32.gmra.mrb[0].mxu0 %v1487
    %v1555 = vpop.f32.mrb[0].mxu0
    %v1556 = vadd.f32 0.0, %v1555
    %v1557 = vpop.f32.mrb[0].mxu0
    %1558 = vdwg.mxu0
    %v1560 = vrot.slane %v1556, 7
    %v1561 = vrot.slane %v1556, 1
    %v1562 = vrot.slane %v1556, 2
    %1563 = vrot.lane.b32.xlu0 %v1560, 32
    %v1564 = vpop.permute.xlu0 %1563
    %1565 = vrot.lane.b32.xlu0 %v1556, 32
    %v1566 = vpop.permute.xlu0 %1565
    %1567 = vrot.lane.b32.xlu0 %v1561, 32
    %v1568 = vpop.permute.xlu0 %1567
    %1569 = vrot.lane.b32.xlu0 %v1562, 32
    %v1570 = vpop.permute.xlu0 %1569
    %v1575 = vadd.f32 %v122, %v1564
    %v1576 = vadd.f32 %v127, %v1566
    %v1577 = vadd.f32 %v132, %v1568
    %v1578 = vadd.f32 %v137, %v1570
    %v1579 = vtanh.pop %v1575
    %v1580 = vtanh.pop %v1576
    %v1581 = vtanh.pop %v1577
    %v1582 = vtanh.pop %v1578
    %v1587 = vrot.slane %v1471, 6
    %v1588 = vrot.slane %v1472, 5
    %v1589 = vsel %vm337, %v1588, %v1587
    %v1590 = vrot.slane %v1473, 4
    %v1591 = vsel %vm340, %v1590, %v1589
    %v1592 = vrot.slane %v1474, 3
    %v1593 = vsel %vm343, %v1592, %v1591
    %v1594 = vsel %vm42, %v1593, 0
    %1596 = vmatprep.subr.mxu0 0.0
    %1597 = vmatpush1.msra.mxu0 %v140
    %1598 = vmatprep.subr.mxu0 0.0
    %1599 = vmatpush1.msra.mxu0 %v141
    %1600 = vmatprep.subr.mxu0 0.0
    %1601 = vmatpush1.msra.mxu0 %v142
    %1602 = vmatprep.subr.mxu0 0.0
    %1603 = vmatpush1.msra.mxu0 %v143
    %1604 = vmatprep.subr.mxu0 0.0
    %1605 = vmatpush1.msra.mxu0 0.0
    %1606 = vmatprep.subr.mxu0 0.0
    %1607 = vmatpush1.msra.mxu0 0.0
    %1608 = vmatprep.subr.mxu0 0.0
    %1609 = vmatpush1.msra.mxu0 0.0
    %1610 = vmatprep.subr.mxu0 0.0
    %1611 = vmatpush1.msra.mxu0 0.0
    %1612 = vmatprep.subr.mxu0 0.0
    %1613 = vmatpush1.msra.mxu0 0.0
    %1614 = vmatprep.subr.mxu0 0.0
    %1615 = vmatpush1.msra.mxu0 0.0
    %1616 = vmatprep.subr.mxu0 0.0
    %1617 = vmatpush1.msra.mxu0 0.0
    %1618 = vmatprep.subr.mxu0 0.0
    %1619 = vmatpush1.msra.mxu0 0.0
    %1620 = vmatprep.subr.mxu0 0.0
    %1621 = vmatpush1.msra.mxu0 0.0
    %1622 = vmatprep.subr.mxu0 0.0
    %1623 = vmatpush1.msra.mxu0 0.0
    %1624 = vmatprep.subr.mxu0 0.0
    %1625 = vmatpush1.msra.mxu0 0.0
    %1626 = vmatprep.subr.mxu0 0.0
    %1627 = vmatpush1.msra.mxu0 0.0
    %1628 = vmatprep.subr.mxu0 0.0
    %1629 = vmatpush1.msra.mxu0 0.0
    %1630 = vmatprep.subr.mxu0 0.0
    %1631 = vmatpush1.msra.mxu0 0.0
    %1632 = vmatprep.subr.mxu0 0.0
    %1633 = vmatpush1.msra.mxu0 0.0
    %1634 = vmatprep.subr.mxu0 0.0
    %1635 = vmatpush1.msra.mxu0 0.0
    %1636 = vmatprep.subr.mxu0 0.0
    %1637 = vmatpush1.msra.mxu0 0.0
    %1638 = vmatprep.subr.mxu0 0.0
    %1639 = vmatpush1.msra.mxu0 0.0
    %1640 = vmatprep.subr.mxu0 0.0
    %1641 = vmatpush1.msra.mxu0 0.0
    %1642 = vmatprep.subr.mxu0 0.0
    %1643 = vmatpush1.msra.mxu0 0.0
    %1644 = vmatprep.subr.mxu0 0.0
    %1645 = vmatpush1.msra.mxu0 0.0
    %1646 = vmatprep.subr.mxu0 0.0
    %1647 = vmatpush1.msra.mxu0 0.0
    %1648 = vmatprep.subr.mxu0 0.0
    %1649 = vmatpush1.msra.mxu0 0.0
    %1650 = vmatprep.subr.mxu0 0.0
    %1651 = vmatpush1.msra.mxu0 0.0
    %1652 = vmatprep.subr.mxu0 0.0
    %1653 = vmatpush1.msra.mxu0 0.0
    %1654 = vmatprep.subr.mxu0 0.0
    %1655 = vmatpush1.msra.mxu0 0.0
    %1656 = vmatprep.subr.mxu0 0.0
    %1657 = vmatpush1.msra.mxu0 0.0
    %1658 = vmatprep.subr.mxu0 0.0
    %1659 = vmatpush1.msra.mxu0 0.0
    %1660 = vmatprep.mubr.f32.mxu0 0.0
    %1661 = vmatmul.mubr.f32.gmra.mrb[0].mxu0 %v1594
    %v1662 = vpop.f32.mrb[0].mxu0
    %v1663 = vadd.f32 0.0, %v1662
    %v1664 = vpop.f32.mrb[0].mxu0
    %1665 = vdwg.mxu0
    %v1667 = vrot.slane %v1663, 1
    %v1668 = vrot.slane %v1663, 2
    %v1669 = vrot.slane %v1663, 3
    %v1670 = vrot.slane %v1663, 4
    %v1675 = vadd.f32 %v122, %v1667
    %v1676 = vadd.f32 %v127, %v1668
    %v1677 = vadd.f32 %v132, %v1669
    %v1678 = vadd.f32 %v137, %v1670
    %v1679 = vtanh.pop %v1675
    %v1680 = vtanh.pop %v1676
    %v1681 = vtanh.pop %v1677
    %v1682 = vtanh.pop %v1678
    %v1687 = vrot.slane %v1579, 1
    %v1688 = vsel %vm337, %v1580, %v1687
    %v1689 = vrot.slane %v1581, 7
    %v1690 = vsel %vm340, %v1689, %v1688
    %v1691 = vrot.slane %v1582, 6
    %v1692 = vsel %vm343, %v1691, %v1690
    %1693 = vrot.lane.b32.xlu0 %v1692, 96
    %v1694 = vpop.permute.xlu0 %1693
    %v1695 = vsel %vm42, %v1694, 0
    %1697 = vmatprep.subr.mxu0 0.0
    %1698 = vmatpush1.msra.mxu0 %v144
    %1699 = vmatprep.subr.mxu0 0.0
    %1700 = vmatpush1.msra.mxu0 %v145
    %1701 = vmatprep.subr.mxu0 0.0
    %1702 = vmatpush1.msra.mxu0 %v146
    %1703 = vmatprep.subr.mxu0 0.0
    %1704 = vmatpush1.msra.mxu0 %v147
    %1705 = vmatprep.subr.mxu0 0.0
    %1706 = vmatpush1.msra.mxu0 0.0
    %1707 = vmatprep.subr.mxu0 0.0
    %1708 = vmatpush1.msra.mxu0 0.0
    %1709 = vmatprep.subr.mxu0 0.0
    %1710 = vmatpush1.msra.mxu0 0.0
    %1711 = vmatprep.subr.mxu0 0.0
    %1712 = vmatpush1.msra.mxu0 0.0
    %1713 = vmatprep.subr.mxu0 0.0
    %1714 = vmatpush1.msra.mxu0 0.0
    %1715 = vmatprep.subr.mxu0 0.0
    %1716 = vmatpush1.msra.mxu0 0.0
    %1717 = vmatprep.subr.mxu0 0.0
    %1718 = vmatpush1.msra.mxu0 0.0
    %1719 = vmatprep.subr.mxu0 0.0
    %1720 = vmatpush1.msra.mxu0 0.0
    %1721 = vmatprep.subr.mxu0 0.0
    %1722 = vmatpush1.msra.mxu0 0.0
    %1723 = vmatprep.subr.mxu0 0.0
    %1724 = vmatpush1.msra.mxu0 0.0
    %1725 = vmatprep.subr.mxu0 0.0
    %1726 = vmatpush1.msra.mxu0 0.0
    %1727 = vmatprep.subr.mxu0 0.0
    %1728 = vmatpush1.msra.mxu0 0.0
    %1729 = vmatprep.subr.mxu0 0.0
    %1730 = vmatpush1.msra.mxu0 0.0
    %1731 = vmatprep.subr.mxu0 0.0
    %1732 = vmatpush1.msra.mxu0 0.0
    %1733 = vmatprep.subr.mxu0 0.0
    %1734 = vmatpush1.msra.mxu0 0.0
    %1735 = vmatprep.subr.mxu0 0.0
    %1736 = vmatpush1.msra.mxu0 0.0
    %1737 = vmatprep.subr.mxu0 0.0
    %1738 = vmatpush1.msra.mxu0 0.0
    %1739 = vmatprep.subr.mxu0 0.0
    %1740 = vmatpush1.msra.mxu0 0.0
    %1741 = vmatprep.subr.mxu0 0.0
    %1742 = vmatpush1.msra.mxu0 0.0
    %1743 = vmatprep.subr.mxu0 0.0
    %1744 = vmatpush1.msra.mxu0 0.0
    %1745 = vmatprep.subr.mxu0 0.0
    %1746 = vmatpush1.msra.mxu0 0.0
    %1747 = vmatprep.subr.mxu0 0.0
    %1748 = vmatpush1.msra.mxu0 0.0
    %1749 = vmatprep.subr.mxu0 0.0
    %1750 = vmatpush1.msra.mxu0 0.0
    %1751 = vmatprep.subr.mxu0 0.0
    %1752 = vmatpush1.msra.mxu0 0.0
    %1753 = vmatprep.subr.mxu0 0.0
    %1754 = vmatpush1.msra.mxu0 0.0
    %1755 = vmatprep.subr.mxu0 0.0
    %1756 = vmatpush1.msra.mxu0 0.0
    %1757 = vmatprep.subr.mxu0 0.0
    %1758 = vmatpush1.msra.mxu0 0.0
    %1759 = vmatprep.subr.mxu0 0.0
    %1760 = vmatpush1.msra.mxu0 0.0
    %1761 = vmatprep.mubr.f32.mxu0 0.0
    %1762 = vmatmul.mubr.f32.gmra.mrb[0].mxu0 %v1695
    %v1763 = vpop.f32.mrb[0].mxu0
    %v1764 = vadd.f32 0.0, %v1763
    %v1765 = vpop.f32.mrb[0].mxu0
    %1766 = vdwg.mxu0
    %v1768 = vrot.slane %v1764, 1
    %v1769 = vrot.slane %v1764, 2
    %v1770 = vrot.slane %v1764, 3
    %1771 = vrot.lane.b32.xlu0 %v1764, 32
    %v1772 = vpop.permute.xlu0 %1771
    %1773 = vrot.lane.b32.xlu0 %v1768, 32
    %v1774 = vpop.permute.xlu0 %1773
    %1775 = vrot.lane.b32.xlu0 %v1769, 32
    %v1776 = vpop.permute.xlu0 %1775
    %1777 = vrot.lane.b32.xlu0 %v1770, 32
    %v1778 = vpop.permute.xlu0 %1777
    %v1783 = vadd.f32 %v122, %v1772
    %v1784 = vadd.f32 %v127, %v1774
    %v1785 = vadd.f32 %v132, %v1776
    %v1786 = vadd.f32 %v137, %v1778
    %v1787 = vtanh.pop %v1783
    %v1788 = vtanh.pop %v1784
    %v1789 = vtanh.pop %v1785
    %v1790 = vtanh.pop %v1786
    %v1795 = vrot.slane %v1679, 7
    %v1796 = vrot.slane %v1680, 6
    %v1797 = vsel %vm337, %v1796, %v1795
    %v1798 = vrot.slane %v1681, 5
    %v1799 = vsel %vm340, %v1798, %v1797
    %v1800 = vrot.slane %v1682, 4
    %v1801 = vsel %vm343, %v1800, %v1799
    %v1807 = vrot.slane %v1787, 4
    %v1808 = vrot.slane %v1788, 3
    %vm1809 = vcmask 1045509
    %v1810 = vsel %vm1809, %v1808, %v1807
    %v1811 = vrot.slane %v1789, 2
    %vm1812 = vcmask 1046534
    %v1813 = vsel %vm1812, %v1811, %v1810
    %v1814 = vrot.slane %v1790, 1
    %vm1815 = vcmask 1047559
    %v1816 = vsel %vm1815, %v1814, %v1813
    %1817 = vrot.lane.b32.xlu0 %v1816, 96
    %v1818 = vpop.permute.xlu0 %1817
    %vm1820 = vcmask 1043456
    %v1821 = vsel %vm1820, %v1801, %v1818
    %v1823 = vrot.slane %v1821, 1
    %v1825 = vrot.slane %v1821, 2
    %v1827 = vrot.slane %v1821, 3
    %vm1829 = vcmask 1040384
    %v1830 = vsel %vm1829, %v1821, %v1823
    %vm1831 = vcmask 1041408
    %v1832 = vsel %vm1831, %v1830, %v1825
    %vm1833 = vcmask 1042432
    %v1834 = vsel %vm1833, %v1832, %v1827
    %v1835 = vrot.slane %v1821, 4
    %v1837 = vsel %vm1829, %v1823, %v1825
    %v1838 = vsel %vm1831, %v1837, %v1827
    %v1839 = vsel %vm1833, %v1838, %v1835
    %v1840 = vld [vmem:[%s5] sm:$0xff]
    %v1841 = vld [vmem:[%s5 + $0x8] sm:$0xff]
    %v1842 = vld [vmem:[%s5 + $0x10] sm:$0xff]
    %v1843 = vld [vmem:[%s5 + $0x18] sm:$0xff]
    %v1844 = vld [vmem:[%s5 + $0x20] sm:$0xff]
    %v1845 = vld [vmem:[%s5 + $0x28] sm:$0xff]
    %v1846 = vld [vmem:[%s5 + $0x30] sm:$0xff]
    %v1847 = vld [vmem:[%s5 + $0x38] sm:$0xff]
    %v1848 = vld [vmem:[%s5 + $0x40] sm:$0xff]
    %v1849 = vld [vmem:[%s5 + $0x48] sm:$0xff]
    %v1850 = vld [vmem:[%s5 + $0x50] sm:$0xff]
    %v1851 = vld [vmem:[%s5 + $0x58] sm:$0xff]
    %v1852 = vld [vmem:[%s5 + $0x60] sm:$0xff]
    %v1853 = vld [vmem:[%s5 + $0x68] sm:$0xff]
    %v1854 = vld [vmem:[%s5 + $0x70] sm:$0xff]
    %v1855 = vld [vmem:[%s5 + $0x78] sm:$0xff]
    %v1857 = vsel %vm42, %v1839, 0
    %1859 = vmatprep.subr.mxu0 %v1849
    %1860 = vmatpush1.msra.mxu0 %v1848
    %1861 = vmatprep.subr.mxu0 %v1851
    %1862 = vmatpush1.msra.mxu0 %v1850
    %1863 = vmatprep.subr.mxu0 %v1853
    %1864 = vmatpush1.msra.mxu0 %v1852
    %1865 = vmatprep.subr.mxu0 %v1855
    %1866 = vmatpush1.msra.mxu0 %v1854
    %1867 = vmatprep.subr.mxu0 0.0
    %1868 = vmatpush1.msra.mxu0 0.0
    %1869 = vmatprep.subr.mxu0 0.0
    %1870 = vmatpush1.msra.mxu0 0.0
    %1871 = vmatprep.subr.mxu0 0.0
    %1872 = vmatpush1.msra.mxu0 0.0
    %1873 = vmatprep.subr.mxu0 0.0
    %1874 = vmatpush1.msra.mxu0 0.0
    %1875 = vmatprep.subr.mxu0 0.0
    %1876 = vmatpush1.msra.mxu0 0.0
    %1877 = vmatprep.subr.mxu0 0.0
    %1878 = vmatpush1.msra.mxu0 0.0
    %1879 = vmatprep.subr.mxu0 0.0
    %1880 = vmatpush1.msra.mxu0 0.0
    %1881 = vmatprep.subr.mxu0 0.0
    %1882 = vmatpush1.msra.mxu0 0.0
    %1883 = vmatprep.subr.mxu0 0.0
    %1884 = vmatpush1.msra.mxu0 0.0
    %1885 = vmatprep.subr.mxu0 0.0
    %1886 = vmatpush1.msra.mxu0 0.0
    %1887 = vmatprep.subr.mxu0 0.0
    %1888 = vmatpush1.msra.mxu0 0.0
    %1889 = vmatprep.subr.mxu0 0.0
    %1890 = vmatpush1.msra.mxu0 0.0
    %1891 = vmatprep.subr.mxu0 0.0
    %1892 = vmatpush1.msra.mxu0 0.0
    %1893 = vmatprep.subr.mxu0 0.0
    %1894 = vmatpush1.msra.mxu0 0.0
    %1895 = vmatprep.subr.mxu0 0.0
    %1896 = vmatpush1.msra.mxu0 0.0
    %1897 = vmatprep.subr.mxu0 0.0
    %1898 = vmatpush1.msra.mxu0 0.0
    %1899 = vmatprep.subr.mxu0 0.0
    %1900 = vmatpush1.msra.mxu0 0.0
    %1901 = vmatprep.subr.mxu0 0.0
    %1902 = vmatpush1.msra.mxu0 0.0
    %1903 = vmatprep.subr.mxu0 0.0
    %1904 = vmatpush1.msra.mxu0 0.0
    %1905 = vmatprep.subr.mxu0 0.0
    %1906 = vmatpush1.msra.mxu0 0.0
    %1907 = vmatprep.subr.mxu0 0.0
    %1908 = vmatpush1.msra.mxu0 0.0
    %1909 = vmatprep.subr.mxu0 0.0
    %1910 = vmatpush1.msra.mxu0 0.0
    %1911 = vmatprep.subr.mxu0 0.0
    %1912 = vmatpush1.msra.mxu0 0.0
    %1913 = vmatprep.subr.mxu0 0.0
    %1914 = vmatpush1.msra.mxu0 0.0
    %1915 = vmatprep.subr.mxu0 0.0
    %1916 = vmatpush1.msra.mxu0 0.0
    %1917 = vmatprep.subr.mxu0 0.0
    %1918 = vmatpush1.msra.mxu0 0.0
    %1919 = vmatprep.subr.mxu0 0.0
    %1920 = vmatpush1.msra.mxu0 0.0
    %1921 = vmatprep.subr.mxu0 0.0
    %1922 = vmatpush1.msra.mxu0 0.0
    %1923 = vmatprep.mubr.f32.mxu0 0.0
    %1924 = vmatmul.mubr.f32.gmra.mrb[0].mxu0 %v1857
    %v1925 = vpop.f32.mrb[0].mxu0
    %v1926 = vadd.f32 0.0, %v1925
    %v1927 = vpop.f32.mrb[0].mxu0
    %v1928 = vadd.f32 0.0, %v1927
    %1929 = vdwg.mxu0
    %v1931 = vsel %vm42, %v1834, 0
    %1933 = vmatprep.subr.mxu0 %v1841
    %1934 = vmatpush1.msra.mxu0 %v1840
    %1935 = vmatprep.subr.mxu0 %v1843
    %1936 = vmatpush1.msra.mxu0 %v1842
    %1937 = vmatprep.subr.mxu0 %v1845
    %1938 = vmatpush1.msra.mxu0 %v1844
    %1939 = vmatprep.subr.mxu0 %v1847
    %1940 = vmatpush1.msra.mxu0 %v1846
    %1941 = vmatprep.subr.mxu0 0.0
    %1942 = vmatpush1.msra.mxu0 0.0
    %1943 = vmatprep.subr.mxu0 0.0
    %1944 = vmatpush1.msra.mxu0 0.0
    %1945 = vmatprep.subr.mxu0 0.0
    %1946 = vmatpush1.msra.mxu0 0.0
    %1947 = vmatprep.subr.mxu0 0.0
    %1948 = vmatpush1.msra.mxu0 0.0
    %1949 = vmatprep.subr.mxu0 0.0
    %1950 = vmatpush1.msra.mxu0 0.0
    %1951 = vmatprep.subr.mxu0 0.0
    %1952 = vmatpush1.msra.mxu0 0.0
    %1953 = vmatprep.subr.mxu0 0.0
    %1954 = vmatpush1.msra.mxu0 0.0
    %1955 = vmatprep.subr.mxu0 0.0
    %1956 = vmatpush1.msra.mxu0 0.0
    %1957 = vmatprep.subr.mxu0 0.0
    %1958 = vmatpush1.msra.mxu0 0.0
    %1959 = vmatprep.subr.mxu0 0.0
    %1960 = vmatpush1.msra.mxu0 0.0
    %1961 = vmatprep.subr.mxu0 0.0
    %1962 = vmatpush1.msra.mxu0 0.0
    %1963 = vmatprep.subr.mxu0 0.0
    %1964 = vmatpush1.msra.mxu0 0.0
    %1965 = vmatprep.subr.mxu0 0.0
    %1966 = vmatpush1.msra.mxu0 0.0
    %1967 = vmatprep.subr.mxu0 0.0
    %1968 = vmatpush1.msra.mxu0 0.0
    %1969 = vmatprep.subr.mxu0 0.0
    %1970 = vmatpush1.msra.mxu0 0.0
    %1971 = vmatprep.subr.mxu0 0.0
    %1972 = vmatpush1.msra.mxu0 0.0
    %1973 = vmatprep.subr.mxu0 0.0
    %1974 = vmatpush1.msra.mxu0 0.0
    %1975 = vmatprep.subr.mxu0 0.0
    %1976 = vmatpush1.msra.mxu0 0.0
    %1977 = vmatprep.subr.mxu0 0.0
    %1978 = vmatpush1.msra.mxu0 0.0
    %1979 = vmatprep.subr.mxu0 0.0
    %1980 = vmatpush1.msra.mxu0 0.0
    %1981 = vmatprep.subr.mxu0 0.0
    %1982 = vmatpush1.msra.mxu0 0.0
    %1983 = vmatprep.subr.mxu0 0.0
    %1984 = vmatpush1.msra.mxu0 0.0
    %1985 = vmatprep.subr.mxu0 0.0
    %1986 = vmatpush1.msra.mxu0 0.0
    %1987 = vmatprep.subr.mxu0 0.0
    %1988 = vmatpush1.msra.mxu0 0.0
    %1989 = vmatprep.subr.mxu0 0.0
    %1990 = vmatpush1.msra.mxu0 0.0
    %1991 = vmatprep.subr.mxu0 0.0
    %1992 = vmatpush1.msra.mxu0 0.0
    %1993 = vmatprep.subr.mxu0 0.0
    %1994 = vmatpush1.msra.mxu0 0.0
    %1995 = vmatprep.subr.mxu0 0.0
    %1996 = vmatpush1.msra.mxu0 0.0
    %1997 = vmatprep.mubr.f32.mxu0 0.0
    %1998 = vmatmul.mubr.f32.gmra.mrb[0].mxu0 %v1931
    %v1999 = vpop.f32.mrb[0].mxu0
    %v2000 = vadd.f32 %v1926, %v1999
    %v2001 = vpop.f32.mrb[0].mxu0
    %v2002 = vadd.f32 %v1928, %v2001
    %2003 = vdwg.mxu0
    %v2004 = vld [vmem:[%s6] sm:$0x3]
    %v2006 = vlaneseq
    %v2007 = vshrl.u32 %v2006, 7
    %v2008 = vsub.s32 0, %v2007
    %v2009 = vrot.slane %v2004, %v2008
    %v2010 = vlaneseq
    %v2011 = vshrl.u32 %v2010, 7
    %v2012 = vsub.s32 1, %v2011
    %v2013 = vrot.slane %v2004, %v2012
    %v2016 = vadd.f32 %v2000, %v2009
    %v2017 = vadd.f32 %v2002, %v2013
    %v2020 = vcombine.low %v2016, %v2017
    %2022 = vst [vmem:[#allocation2] sm:$0xff] %v2020
    // Predicated region
    $region30: #{rnn_forward.1} parent=1 // pred_check
      _
    $region31: #{rnn_forward.1} parent=1 // pred_check_branch
      %2024 = sbr.rel (0) target = $region33
    $region32: #{rnn_forward.1} parent=1 // pred_region
      %s2026 = ssub.s32 128, 128
      %2027 = vsyncadd [#allocation3], %s2026
      %s2029 = sshll.u32 [#allocation2], 4
      %s2030 = int_to_ptr.vmem [resolvable:$true] %s2029
      %2032 = dma.vmem_to_hbm [thread:$0]  %s2030, 128, %s7, [#allocation3]
    $region33: #{rnn_forward.1} parent=1 // pred_fallthru
      _
    // Predicated region
    $region34: #{rnn_forward.1} parent=1 // pred_check
      _
    $region35: #{rnn_forward.1} parent=1 // pred_check_branch
      %2034 = sbr.rel (0) target = $region37
    $region36: #{rnn_forward.1} parent=1 // pred_region
      %2035 = dma.done [#allocation3], 128
    $region37: #{rnn_forward.1} parent=1 // pred_fallthru
      _
    %2036 = vsyncpa [#allocation3], 1

</llo_original>
